<compile_context>
chip_gen: v7x
topology: tpu7x:2x2x1
jax: 0.10.0
libtpu: 0.0.40
codegen_flags: <defaults>
</compile_context>

<pallas_src>
import jax
import jax.numpy as jnp
from jax.experimental import pallas as pl
from jax.experimental.pallas import tpu as pltpu

_VMEM_LIMIT = 32 * 1024 * 1024  # safe scoped-VMEM request on v5e/v6e/v7x


def conv_update_forward(x, message_list, params, *, compute_dtype=jnp.bfloat16):
    """x: (N, hidden, H, W) previous hidden state; message_list: list of (N, hidden, H, W)."""
    wg, bg, wc, bc = params
    n, c_h, hgt, wid = x.shape

    msg = (jnp.concatenate(message_list, axis=1)
           if len(message_list) > 1 else message_list[0])
    c_m = msg.shape[1]
    c_g = c_m + c_h
    assert wg.shape == (2 * c_h, c_g, 3, 3) and wc.shape == (c_h, c_g, 3, 3)

    wpad = wid + 2                  # width incl. left pad + right pad
    hp3 = hgt + 3                   # top pad + H + bottom pad + 1 slack row
    hwp = hgt * wpad                # flattened "output grid" length (2 junk cols/row)
    comb_len = hp3 * wpad           # flattened padded-input length

    # --- glue (cheap XLA ops): concat, zero-pad, flatten spatial to the lane dim ---
    comb = jnp.concatenate([msg, x], axis=1)                             # (N, Cg, H, W)
    comb_pad = jnp.pad(comb, ((0, 0), (0, 0), (1, 2), (1, 1)))           # (N, Cg, H+3, W+2)
    comb_flat = comb_pad.reshape(n, c_g, comb_len).astype(compute_dtype)

    h_flat = jnp.pad(x, ((0, 0), (0, 0), (0, 0), (0, 2)))                # (N, Ch, H, W+2)
    h_flat = h_flat.reshape(n, c_h, hwp).astype(jnp.float32)

    # Tap-major weights: k = ky*3 + kx  ->  (9, Cout, Cin)
    wg_t = jnp.transpose(wg, (2, 3, 0, 1)).reshape(9, 2 * c_h, c_g).astype(compute_dtype)
    wcm_t = jnp.transpose(wc[:, :c_m], (2, 3, 0, 1)).reshape(9, c_h, c_m).astype(compute_dtype)
    wch_t = jnp.transpose(wc[:, c_m:], (2, 3, 0, 1)).reshape(9, c_h, c_h).astype(compute_dtype)
    bg_c = bg.reshape(2 * c_h, 1).astype(jnp.float32)
    bc_c = bc.reshape(c_h, 1).astype(jnp.float32)

    def kernel(comb_ref, h_ref, wg_ref, bg_ref, wcm_ref, wch_ref, bc_ref,
               o_ref, rh_ref):
        h = h_ref[0].astype(jnp.float32)                              # (Ch, HWp)

        # ---- gate conv + message half of candidate conv (shared windows) ----
        gates = jnp.zeros((2 * c_h, hwp), jnp.float32)
        cand = jnp.zeros((c_h, hwp), jnp.float32)
        for k in range(9):
            dy, dx = divmod(k, 3)
            off = dy * wpad + dx                                      # static offset
            win = comb_ref[0, :, pl.ds(off, hwp)]                     # (Cg, HWp)
            gates = gates + jnp.dot(wg_ref[k], win,
                                    preferred_element_type=jnp.float32)
            cand = cand + jnp.dot(wcm_ref[k], win[:c_m],
                                  preferred_element_type=jnp.float32)
        gates = gates + bg_ref[...]
        reset = jax.nn.sigmoid(gates[:c_h])                           # (Ch, HWp)
        update = jax.nn.sigmoid(gates[c_h:])                          # (Ch, HWp)

        # ---- reset-gated hidden state, re-padded into scratch (borders stay zero) ----
        rh_ref[...] = jnp.zeros(rh_ref.shape, rh_ref.dtype)
        rh_ref[:, pl.ds(wpad + 1, hwp)] = (reset * h).astype(rh_ref.dtype)

        # ---- hidden half of the candidate conv ----
        for k in range(9):
            dy, dx = divmod(k, 3)
            off = dy * wpad + dx
            cand = cand + jnp.dot(wch_ref[k], rh_ref[:, pl.ds(off, hwp)],
                                  preferred_element_type=jnp.float32)
        cnm = jnp.tanh(cand + bc_ref[...])

        o_ref[0] = ((1.0 - update) * h + update * cnm).astype(o_ref.dtype)

    out = pl.pallas_call(
        kernel,
        out_shape=jax.ShapeDtypeStruct((n, c_h, hwp), x.dtype),
        grid_spec=pltpu.PrefetchScalarGridSpec(
            num_scalar_prefetch=0,
            grid=(n,),
            in_specs=[
                pl.BlockSpec((1, c_g, comb_len), lambda i: (i, 0, 0)),   # padded combined
                pl.BlockSpec((1, c_h, hwp), lambda i: (i, 0, 0)),        # h (f32)
                pl.BlockSpec((9, 2 * c_h, c_g), lambda i: (0, 0, 0)),    # gate weights
                pl.BlockSpec((2 * c_h, 1), lambda i: (0, 0)),            # gate bias
                pl.BlockSpec((9, c_h, c_m), lambda i: (0, 0, 0)),        # cand W (msg part)
                pl.BlockSpec((9, c_h, c_h), lambda i: (0, 0, 0)),        # cand W (h part)
                pl.BlockSpec((c_h, 1), lambda i: (0, 0)),                # cand bias
            ],
            out_specs=pl.BlockSpec((1, c_h, hwp), lambda i: (i, 0, 0)),
            scratch_shapes=[pltpu.VMEM((c_h, comb_len), compute_dtype)], # padded reset*h
        ),
        compiler_params=pltpu.CompilerParams(
            dimension_semantics=("parallel",),
            vmem_limit_bytes=_VMEM_LIMIT),
    )(comb_flat, h_flat, wg_t, bg_c, wcm_t, wch_t, bc_c)

    # Drop the 2 junk columns per row and restore NCHW.
    return out.reshape(n, c_h, hgt, wpad)[:, :, :, :wid]


def init_params(key, hidden_dim, paths_len, dtype=jnp.float32):
    c_g = paths_len * hidden_dim + hidden_dim
    k1, k2, k3, k4 = jax.random.split(key, 4)
    scale = 0.5 / (9.0 * c_g) ** 0.5
    wg = scale * jax.random.normal(k1, (2 * hidden_dim, c_g, 3, 3), dtype)
    bg = 0.1 * jax.random.normal(k2, (2 * hidden_dim,), dtype)
    wc = scale * jax.random.normal(k3, (hidden_dim, c_g, 3, 3), dtype)
    bc = 0.1 * jax.random.normal(k4, (hidden_dim,), dtype)
    return wg, bg, wc, bc


def _reference(x, message_list, params, compute_dtype=jnp.float32):
    """Pure-JAX ConvGRU-cell reference, mirroring the kernel's operand-dtype handling."""
    wg, bg, wc, bc = params
    c_h = x.shape[1]
    msg = (jnp.concatenate(message_list, axis=1)
           if len(message_list) > 1 else message_list[0])

    def cast(a):
        return a.astype(compute_dtype).astype(jnp.float32)

    def conv(inp, w):
        return jax.lax.conv_general_dilated(
            inp, w, window_strides=(1, 1), padding="SAME",
            dimension_numbers=("NCHW", "OIHW", "NCHW"),
            precision=jax.lax.Precision.HIGHEST)

    comb = jnp.concatenate([msg, x], axis=1)
    gates = conv(cast(comb), cast(wg)) + bg[None, :, None, None]
    reset = jax.nn.sigmoid(gates[:, :c_h])
    update = jax.nn.sigmoid(gates[:, c_h:])
    comb2 = jnp.concatenate([cast(msg), cast(reset * x)], axis=1)
    cnm = jnp.tanh(conv(comb2, cast(wc)) + bc[None, :, None, None])
    return (1.0 - update) * x + update * cnm


if __name__ == "__main__":
    hidden_dim = 16
    paths_len = 3
    batch, height, width = 2, 8, 8

    key = jax.random.PRNGKey(0)
    pkey, xkey, *mkeys = jax.random.split(key, 2 + paths_len)

    params = init_params(pkey, hidden_dim, paths_len)
    x = jax.random.normal(xkey, (batch, hidden_dim, height, width), jnp.float32)
    message_list = [
        jax.random.normal(k, (batch, hidden_dim, height, width), jnp.float32)
        for k in mkeys
    ]

    out = conv_update_forward(x, message_list, params)
    out = jax.block_until_ready(out)
    assert out.shape == (batch, hidden_dim, height, width)

    # Tight check vs. a reference that mirrors the bf16 matmul-operand rounding.
    ref_bf16 = _reference(x, message_list, params, compute_dtype=jnp.bfloat16)
    assert jnp.allclose(out, ref_bf16, atol=3e-3, rtol=3e-3), \
        float(jnp.max(jnp.abs(out - ref_bf16)))

    # Looser sanity check vs. full-f32 module semantics.
    ref_f32 = _reference(x, message_list, params, compute_dtype=jnp.float32)
    assert jnp.allclose(out, ref_f32, atol=5e-2, rtol=5e-2), \
        float(jnp.max(jnp.abs(out - ref_f32)))

    print("KERNEL_OK")
</pallas_src>

<mosaic_0001>
module attributes {stable_mosaic.version = 11 : i64} {
  func.func @kernel(%arg0: i32, %arg1: memref<1x64x110xbf16, #tpu.memory_space<vmem>>, %arg2: memref<1x16x80xf32, #tpu.memory_space<vmem>>, %arg3: memref<9x32x64xbf16, #tpu.memory_space<vmem>>, %arg4: memref<32x1xf32, #tpu.memory_space<vmem>>, %arg5: memref<9x16x48xbf16, #tpu.memory_space<vmem>>, %arg6: memref<9x16x16xbf16, #tpu.memory_space<vmem>>, %arg7: memref<16x1xf32, #tpu.memory_space<vmem>>, %arg8: memref<1x16x80xf32, #tpu.memory_space<vmem>>, %arg9: memref<16x110xbf16, #tpu.memory_space<vmem>>) attributes {dimension_semantics = [#tpu.dimension_semantics<parallel>], iteration_bounds = array<i64: 2>, scalar_prefetch = 0 : i64, scratch_operands = 1 : i64, tpu.core_type = #tpu.core_type<tc>, window_params = [{transform_indices = @transform_0, window_bounds = array<i64: 1, 64, 110>}, {transform_indices = @transform_1, window_bounds = array<i64: 1, 16, 80>}, {pipeline_mode = #tpu.pipeline_mode<synchronous>, transform_indices = @transform_2, window_bounds = array<i64: 9, 32, 64>}, {pipeline_mode = #tpu.pipeline_mode<synchronous>, transform_indices = @transform_3, window_bounds = array<i64: 32, 1>}, {pipeline_mode = #tpu.pipeline_mode<synchronous>, transform_indices = @transform_4, window_bounds = array<i64: 9, 16, 48>}, {pipeline_mode = #tpu.pipeline_mode<synchronous>, transform_indices = @transform_5, window_bounds = array<i64: 9, 16, 16>}, {pipeline_mode = #tpu.pipeline_mode<synchronous>, transform_indices = @transform_6, window_bounds = array<i64: 16, 1>}, {transform_indices = @transform_7, window_bounds = array<i64: 1, 16, 80>}]} {
    %c0 = arith.constant 0 : index
    %c0_0 = arith.constant 0 : index
    %c0_1 = arith.constant 0 : index
    %0 = vector.load %arg2[%c0, %c0_0, %c0_1] : memref<1x16x80xf32, #tpu.memory_space<vmem>>, vector<1x16x80xf32>
    %1 = vector.shape_cast %0 : vector<1x16x80xf32> to vector<16x80xf32>
    %cst = arith.constant 0.000000e+00 : f32
    %2 = vector.broadcast %cst : f32 to vector<32x80xf32>
    %cst_2 = arith.constant 0.000000e+00 : f32
    %3 = vector.broadcast %cst_2 : f32 to vector<16x80xf32>
    %c0_3 = arith.constant 0 : index
    %c0_4 = arith.constant 0 : index
    %c0_5 = arith.constant 0 : index
    %4 = vector.load %arg1[%c0_3, %c0_4, %c0_5] : memref<1x64x110xbf16, #tpu.memory_space<vmem>>, vector<1x64x80xbf16>
    %5 = vector.shape_cast %4 : vector<1x64x80xbf16> to vector<64x80xbf16>
    %c0_6 = arith.constant 0 : index
    %c0_7 = arith.constant 0 : index
    %c0_8 = arith.constant 0 : index
    %6 = vector.load %arg3[%c0_6, %c0_7, %c0_8] : memref<9x32x64xbf16, #tpu.memory_space<vmem>>, vector<1x32x64xbf16>
    %7 = vector.shape_cast %6 : vector<1x32x64xbf16> to vector<32x64xbf16>
    %cst_9 = arith.constant dense<0.000000e+00> : vector<32x80xf32>
    %8 = tpu.matmul %7, %5, %cst_9 {dimension_numbers = #tpu.dot_dimension_numbers<[1], [0], [0], [1], [0, 0, 1, 1], [], []>} : vector<32x64xbf16>, vector<64x80xbf16>, vector<32x80xf32> -> vector<32x80xf32>
    %9 = arith.addf %2, %8 : vector<32x80xf32>
    %c0_10 = arith.constant 0 : index
    %c0_11 = arith.constant 0 : index
    %c0_12 = arith.constant 0 : index
    %10 = vector.load %arg5[%c0_10, %c0_11, %c0_12] : memref<9x16x48xbf16, #tpu.memory_space<vmem>>, vector<1x16x48xbf16>
    %11 = vector.shape_cast %10 : vector<1x16x48xbf16> to vector<16x48xbf16>
    %12 = vector.extract_strided_slice %5 {offsets = [0, 0], sizes = [48, 80], strides = [1, 1]} : vector<64x80xbf16> to vector<48x80xbf16>
    %cst_13 = arith.constant dense<0.000000e+00> : vector<16x80xf32>
    %13 = tpu.matmul %11, %12, %cst_13 {dimension_numbers = #tpu.dot_dimension_numbers<[1], [0], [0], [1], [0, 0, 1, 1], [], []>} : vector<16x48xbf16>, vector<48x80xbf16>, vector<16x80xf32> -> vector<16x80xf32>
    %14 = arith.addf %3, %13 : vector<16x80xf32>
    %c0_14 = arith.constant 0 : index
    %c0_15 = arith.constant 0 : index
    %c1 = arith.constant 1 : index
    %15 = vector.load %arg1[%c0_14, %c0_15, %c1] : memref<1x64x110xbf16, #tpu.memory_space<vmem>>, vector<1x64x80xbf16>
    %16 = vector.shape_cast %15 : vector<1x64x80xbf16> to vector<64x80xbf16>
    %c1_16 = arith.constant 1 : index
    %c0_17 = arith.constant 0 : index
    %c0_18 = arith.constant 0 : index
    %17 = vector.load %arg3[%c1_16, %c0_17, %c0_18] : memref<9x32x64xbf16, #tpu.memory_space<vmem>>, vector<1x32x64xbf16>
    %18 = vector.shape_cast %17 : vector<1x32x64xbf16> to vector<32x64xbf16>
    %cst_19 = arith.constant dense<0.000000e+00> : vector<32x80xf32>
    %19 = tpu.matmul %18, %16, %cst_19 {dimension_numbers = #tpu.dot_dimension_numbers<[1], [0], [0], [1], [0, 0, 1, 1], [], []>} : vector<32x64xbf16>, vector<64x80xbf16>, vector<32x80xf32> -> vector<32x80xf32>
    %20 = arith.addf %9, %19 : vector<32x80xf32>
    %c1_20 = arith.constant 1 : index
    %c0_21 = arith.constant 0 : index
    %c0_22 = arith.constant 0 : index
    %21 = vector.load %arg5[%c1_20, %c0_21, %c0_22] : memref<9x16x48xbf16, #tpu.memory_space<vmem>>, vector<1x16x48xbf16>
    %22 = vector.shape_cast %21 : vector<1x16x48xbf16> to vector<16x48xbf16>
    %23 = vector.extract_strided_slice %16 {offsets = [0, 0], sizes = [48, 80], strides = [1, 1]} : vector<64x80xbf16> to vector<48x80xbf16>
    %cst_23 = arith.constant dense<0.000000e+00> : vector<16x80xf32>
    %24 = tpu.matmul %22, %23, %cst_23 {dimension_numbers = #tpu.dot_dimension_numbers<[1], [0], [0], [1], [0, 0, 1, 1], [], []>} : vector<16x48xbf16>, vector<48x80xbf16>, vector<16x80xf32> -> vector<16x80xf32>
    %25 = arith.addf %14, %24 : vector<16x80xf32>
    %c0_24 = arith.constant 0 : index
    %c0_25 = arith.constant 0 : index
    %c2 = arith.constant 2 : index
    %26 = vector.load %arg1[%c0_24, %c0_25, %c2] : memref<1x64x110xbf16, #tpu.memory_space<vmem>>, vector<1x64x80xbf16>
    %27 = vector.shape_cast %26 : vector<1x64x80xbf16> to vector<64x80xbf16>
    %c2_26 = arith.constant 2 : index
    %c0_27 = arith.constant 0 : index
    %c0_28 = arith.constant 0 : index
    %28 = vector.load %arg3[%c2_26, %c0_27, %c0_28] : memref<9x32x64xbf16, #tpu.memory_space<vmem>>, vector<1x32x64xbf16>
    %29 = vector.shape_cast %28 : vector<1x32x64xbf16> to vector<32x64xbf16>
    %cst_29 = arith.constant dense<0.000000e+00> : vector<32x80xf32>
    %30 = tpu.matmul %29, %27, %cst_29 {dimension_numbers = #tpu.dot_dimension_numbers<[1], [0], [0], [1], [0, 0, 1, 1], [], []>} : vector<32x64xbf16>, vector<64x80xbf16>, vector<32x80xf32> -> vector<32x80xf32>
    %31 = arith.addf %20, %30 : vector<32x80xf32>
    %c2_30 = arith.constant 2 : index
    %c0_31 = arith.constant 0 : index
    %c0_32 = arith.constant 0 : index
    %32 = vector.load %arg5[%c2_30, %c0_31, %c0_32] : memref<9x16x48xbf16, #tpu.memory_space<vmem>>, vector<1x16x48xbf16>
    %33 = vector.shape_cast %32 : vector<1x16x48xbf16> to vector<16x48xbf16>
    %34 = vector.extract_strided_slice %27 {offsets = [0, 0], sizes = [48, 80], strides = [1, 1]} : vector<64x80xbf16> to vector<48x80xbf16>
    %cst_33 = arith.constant dense<0.000000e+00> : vector<16x80xf32>
    %35 = tpu.matmul %33, %34, %cst_33 {dimension_numbers = #tpu.dot_dimension_numbers<[1], [0], [0], [1], [0, 0, 1, 1], [], []>} : vector<16x48xbf16>, vector<48x80xbf16>, vector<16x80xf32> -> vector<16x80xf32>
    %36 = arith.addf %25, %35 : vector<16x80xf32>
    %c0_34 = arith.constant 0 : index
    %c0_35 = arith.constant 0 : index
    %c10 = arith.constant 10 : index
    %37 = vector.load %arg1[%c0_34, %c0_35, %c10] : memref<1x64x110xbf16, #tpu.memory_space<vmem>>, vector<1x64x80xbf16>
    %38 = vector.shape_cast %37 : vector<1x64x80xbf16> to vector<64x80xbf16>
    %c3 = arith.constant 3 : index
    %c0_36 = arith.constant 0 : index
    %c0_37 = arith.constant 0 : index
    %39 = vector.load %arg3[%c3, %c0_36, %c0_37] : memref<9x32x64xbf16, #tpu.memory_space<vmem>>, vector<1x32x64xbf16>
    %40 = vector.shape_cast %39 : vector<1x32x64xbf16> to vector<32x64xbf16>
    %cst_38 = arith.constant dense<0.000000e+00> : vector<32x80xf32>
    %41 = tpu.matmul %40, %38, %cst_38 {dimension_numbers = #tpu.dot_dimension_numbers<[1], [0], [0], [1], [0, 0, 1, 1], [], []>} : vector<32x64xbf16>, vector<64x80xbf16>, vector<32x80xf32> -> vector<32x80xf32>
    %42 = arith.addf %31, %41 : vector<32x80xf32>
    %c3_39 = arith.constant 3 : index
    %c0_40 = arith.constant 0 : index
    %c0_41 = arith.constant 0 : index
    %43 = vector.load %arg5[%c3_39, %c0_40, %c0_41] : memref<9x16x48xbf16, #tpu.memory_space<vmem>>, vector<1x16x48xbf16>
    %44 = vector.shape_cast %43 : vector<1x16x48xbf16> to vector<16x48xbf16>
    %45 = vector.extract_strided_slice %38 {offsets = [0, 0], sizes = [48, 80], strides = [1, 1]} : vector<64x80xbf16> to vector<48x80xbf16>
    %cst_42 = arith.constant dense<0.000000e+00> : vector<16x80xf32>
    %46 = tpu.matmul %44, %45, %cst_42 {dimension_numbers = #tpu.dot_dimension_numbers<[1], [0], [0], [1], [0, 0, 1, 1], [], []>} : vector<16x48xbf16>, vector<48x80xbf16>, vector<16x80xf32> -> vector<16x80xf32>
    %47 = arith.addf %36, %46 : vector<16x80xf32>
    %c0_43 = arith.constant 0 : index
    %c0_44 = arith.constant 0 : index
    %c11 = arith.constant 11 : index
    %48 = vector.load %arg1[%c0_43, %c0_44, %c11] : memref<1x64x110xbf16, #tpu.memory_space<vmem>>, vector<1x64x80xbf16>
    %49 = vector.shape_cast %48 : vector<1x64x80xbf16> to vector<64x80xbf16>
    %c4 = arith.constant 4 : index
    %c0_45 = arith.constant 0 : index
    %c0_46 = arith.constant 0 : index
    %50 = vector.load %arg3[%c4, %c0_45, %c0_46] : memref<9x32x64xbf16, #tpu.memory_space<vmem>>, vector<1x32x64xbf16>
    %51 = vector.shape_cast %50 : vector<1x32x64xbf16> to vector<32x64xbf16>
    %cst_47 = arith.constant dense<0.000000e+00> : vector<32x80xf32>
    %52 = tpu.matmul %51, %49, %cst_47 {dimension_numbers = #tpu.dot_dimension_numbers<[1], [0], [0], [1], [0, 0, 1, 1], [], []>} : vector<32x64xbf16>, vector<64x80xbf16>, vector<32x80xf32> -> vector<32x80xf32>
    %53 = arith.addf %42, %52 : vector<32x80xf32>
    %c4_48 = arith.constant 4 : index
    %c0_49 = arith.constant 0 : index
    %c0_50 = arith.constant 0 : index
    %54 = vector.load %arg5[%c4_48, %c0_49, %c0_50] : memref<9x16x48xbf16, #tpu.memory_space<vmem>>, vector<1x16x48xbf16>
    %55 = vector.shape_cast %54 : vector<1x16x48xbf16> to vector<16x48xbf16>
    %56 = vector.extract_strided_slice %49 {offsets = [0, 0], sizes = [48, 80], strides = [1, 1]} : vector<64x80xbf16> to vector<48x80xbf16>
    %cst_51 = arith.constant dense<0.000000e+00> : vector<16x80xf32>
    %57 = tpu.matmul %55, %56, %cst_51 {dimension_numbers = #tpu.dot_dimension_numbers<[1], [0], [0], [1], [0, 0, 1, 1], [], []>} : vector<16x48xbf16>, vector<48x80xbf16>, vector<16x80xf32> -> vector<16x80xf32>
    %58 = arith.addf %47, %57 : vector<16x80xf32>
    %c0_52 = arith.constant 0 : index
    %c0_53 = arith.constant 0 : index
    %c12 = arith.constant 12 : index
    %59 = vector.load %arg1[%c0_52, %c0_53, %c12] : memref<1x64x110xbf16, #tpu.memory_space<vmem>>, vector<1x64x80xbf16>
    %60 = vector.shape_cast %59 : vector<1x64x80xbf16> to vector<64x80xbf16>
    %c5 = arith.constant 5 : index
    %c0_54 = arith.constant 0 : index
    %c0_55 = arith.constant 0 : index
    %61 = vector.load %arg3[%c5, %c0_54, %c0_55] : memref<9x32x64xbf16, #tpu.memory_space<vmem>>, vector<1x32x64xbf16>
    %62 = vector.shape_cast %61 : vector<1x32x64xbf16> to vector<32x64xbf16>
    %cst_56 = arith.constant dense<0.000000e+00> : vector<32x80xf32>
    %63 = tpu.matmul %62, %60, %cst_56 {dimension_numbers = #tpu.dot_dimension_numbers<[1], [0], [0], [1], [0, 0, 1, 1], [], []>} : vector<32x64xbf16>, vector<64x80xbf16>, vector<32x80xf32> -> vector<32x80xf32>
    %64 = arith.addf %53, %63 : vector<32x80xf32>
    %c5_57 = arith.constant 5 : index
    %c0_58 = arith.constant 0 : index
    %c0_59 = arith.constant 0 : index
    %65 = vector.load %arg5[%c5_57, %c0_58, %c0_59] : memref<9x16x48xbf16, #tpu.memory_space<vmem>>, vector<1x16x48xbf16>
    %66 = vector.shape_cast %65 : vector<1x16x48xbf16> to vector<16x48xbf16>
    %67 = vector.extract_strided_slice %60 {offsets = [0, 0], sizes = [48, 80], strides = [1, 1]} : vector<64x80xbf16> to vector<48x80xbf16>
    %cst_60 = arith.constant dense<0.000000e+00> : vector<16x80xf32>
    %68 = tpu.matmul %66, %67, %cst_60 {dimension_numbers = #tpu.dot_dimension_numbers<[1], [0], [0], [1], [0, 0, 1, 1], [], []>} : vector<16x48xbf16>, vector<48x80xbf16>, vector<16x80xf32> -> vector<16x80xf32>
    %69 = arith.addf %58, %68 : vector<16x80xf32>
    %c0_61 = arith.constant 0 : index
    %c0_62 = arith.constant 0 : index
    %c20 = arith.constant 20 : index
    %70 = vector.load %arg1[%c0_61, %c0_62, %c20] : memref<1x64x110xbf16, #tpu.memory_space<vmem>>, vector<1x64x80xbf16>
    %71 = vector.shape_cast %70 : vector<1x64x80xbf16> to vector<64x80xbf16>
    %c6 = arith.constant 6 : index
    %c0_63 = arith.constant 0 : index
    %c0_64 = arith.constant 0 : index
    %72 = vector.load %arg3[%c6, %c0_63, %c0_64] : memref<9x32x64xbf16, #tpu.memory_space<vmem>>, vector<1x32x64xbf16>
    %73 = vector.shape_cast %72 : vector<1x32x64xbf16> to vector<32x64xbf16>
    %cst_65 = arith.constant dense<0.000000e+00> : vector<32x80xf32>
    %74 = tpu.matmul %73, %71, %cst_65 {dimension_numbers = #tpu.dot_dimension_numbers<[1], [0], [0], [1], [0, 0, 1, 1], [], []>} : vector<32x64xbf16>, vector<64x80xbf16>, vector<32x80xf32> -> vector<32x80xf32>
    %75 = arith.addf %64, %74 : vector<32x80xf32>
    %c6_66 = arith.constant 6 : index
    %c0_67 = arith.constant 0 : index
    %c0_68 = arith.constant 0 : index
    %76 = vector.load %arg5[%c6_66, %c0_67, %c0_68] : memref<9x16x48xbf16, #tpu.memory_space<vmem>>, vector<1x16x48xbf16>
    %77 = vector.shape_cast %76 : vector<1x16x48xbf16> to vector<16x48xbf16>
    %78 = vector.extract_strided_slice %71 {offsets = [0, 0], sizes = [48, 80], strides = [1, 1]} : vector<64x80xbf16> to vector<48x80xbf16>
    %cst_69 = arith.constant dense<0.000000e+00> : vector<16x80xf32>
    %79 = tpu.matmul %77, %78, %cst_69 {dimension_numbers = #tpu.dot_dimension_numbers<[1], [0], [0], [1], [0, 0, 1, 1], [], []>} : vector<16x48xbf16>, vector<48x80xbf16>, vector<16x80xf32> -> vector<16x80xf32>
    %80 = arith.addf %69, %79 : vector<16x80xf32>
    %c0_70 = arith.constant 0 : index
    %c0_71 = arith.constant 0 : index
    %c21 = arith.constant 21 : index
    %81 = vector.load %arg1[%c0_70, %c0_71, %c21] : memref<1x64x110xbf16, #tpu.memory_space<vmem>>, vector<1x64x80xbf16>
    %82 = vector.shape_cast %81 : vector<1x64x80xbf16> to vector<64x80xbf16>
    %c7 = arith.constant 7 : index
    %c0_72 = arith.constant 0 : index
    %c0_73 = arith.constant 0 : index
    %83 = vector.load %arg3[%c7, %c0_72, %c0_73] : memref<9x32x64xbf16, #tpu.memory_space<vmem>>, vector<1x32x64xbf16>
    %84 = vector.shape_cast %83 : vector<1x32x64xbf16> to vector<32x64xbf16>
    %cst_74 = arith.constant dense<0.000000e+00> : vector<32x80xf32>
    %85 = tpu.matmul %84, %82, %cst_74 {dimension_numbers = #tpu.dot_dimension_numbers<[1], [0], [0], [1], [0, 0, 1, 1], [], []>} : vector<32x64xbf16>, vector<64x80xbf16>, vector<32x80xf32> -> vector<32x80xf32>
    %86 = arith.addf %75, %85 : vector<32x80xf32>
    %c7_75 = arith.constant 7 : index
    %c0_76 = arith.constant 0 : index
    %c0_77 = arith.constant 0 : index
    %87 = vector.load %arg5[%c7_75, %c0_76, %c0_77] : memref<9x16x48xbf16, #tpu.memory_space<vmem>>, vector<1x16x48xbf16>
    %88 = vector.shape_cast %87 : vector<1x16x48xbf16> to vector<16x48xbf16>
    %89 = vector.extract_strided_slice %82 {offsets = [0, 0], sizes = [48, 80], strides = [1, 1]} : vector<64x80xbf16> to vector<48x80xbf16>
    %cst_78 = arith.constant dense<0.000000e+00> : vector<16x80xf32>
    %90 = tpu.matmul %88, %89, %cst_78 {dimension_numbers = #tpu.dot_dimension_numbers<[1], [0], [0], [1], [0, 0, 1, 1], [], []>} : vector<16x48xbf16>, vector<48x80xbf16>, vector<16x80xf32> -> vector<16x80xf32>
    %91 = arith.addf %80, %90 : vector<16x80xf32>
    %c0_79 = arith.constant 0 : index
    %c0_80 = arith.constant 0 : index
    %c22 = arith.constant 22 : index
    %92 = vector.load %arg1[%c0_79, %c0_80, %c22] : memref<1x64x110xbf16, #tpu.memory_space<vmem>>, vector<1x64x80xbf16>
    %93 = vector.shape_cast %92 : vector<1x64x80xbf16> to vector<64x80xbf16>
    %c8 = arith.constant 8 : index
    %c0_81 = arith.constant 0 : index
    %c0_82 = arith.constant 0 : index
    %94 = vector.load %arg3[%c8, %c0_81, %c0_82] : memref<9x32x64xbf16, #tpu.memory_space<vmem>>, vector<1x32x64xbf16>
    %95 = vector.shape_cast %94 : vector<1x32x64xbf16> to vector<32x64xbf16>
    %cst_83 = arith.constant dense<0.000000e+00> : vector<32x80xf32>
    %96 = tpu.matmul %95, %93, %cst_83 {dimension_numbers = #tpu.dot_dimension_numbers<[1], [0], [0], [1], [0, 0, 1, 1], [], []>} : vector<32x64xbf16>, vector<64x80xbf16>, vector<32x80xf32> -> vector<32x80xf32>
    %97 = arith.addf %86, %96 : vector<32x80xf32>
    %c8_84 = arith.constant 8 : index
    %c0_85 = arith.constant 0 : index
    %c0_86 = arith.constant 0 : index
    %98 = vector.load %arg5[%c8_84, %c0_85, %c0_86] : memref<9x16x48xbf16, #tpu.memory_space<vmem>>, vector<1x16x48xbf16>
    %99 = vector.shape_cast %98 : vector<1x16x48xbf16> to vector<16x48xbf16>
    %100 = vector.extract_strided_slice %93 {offsets = [0, 0], sizes = [48, 80], strides = [1, 1]} : vector<64x80xbf16> to vector<48x80xbf16>
    %cst_87 = arith.constant dense<0.000000e+00> : vector<16x80xf32>
    %101 = tpu.matmul %99, %100, %cst_87 {dimension_numbers = #tpu.dot_dimension_numbers<[1], [0], [0], [1], [0, 0, 1, 1], [], []>} : vector<16x48xbf16>, vector<48x80xbf16>, vector<16x80xf32> -> vector<16x80xf32>
    %102 = arith.addf %91, %101 : vector<16x80xf32>
    %c0_88 = arith.constant 0 : index
    %c0_89 = arith.constant 0 : index
    %103 = vector.load %arg4[%c0_88, %c0_89] : memref<32x1xf32, #tpu.memory_space<vmem>>, vector<32x1xf32>
    %104 = vector.broadcast %103 : vector<32x1xf32> to vector<32x80xf32>
    %105 = arith.addf %97, %104 : vector<32x80xf32>
    %106 = vector.extract_strided_slice %105 {offsets = [0, 0], sizes = [16, 80], strides = [1, 1]} : vector<32x80xf32> to vector<16x80xf32>
    %107 = arith.negf %106 : vector<16x80xf32>
    %108 = math.exp %107 : vector<16x80xf32>
    %cst_90 = arith.constant 1.000000e+00 : f32
    %109 = vector.broadcast %cst_90 : f32 to vector<16x80xf32>
    %110 = arith.addf %109, %108 : vector<16x80xf32>
    %111 = arith.divf %109, %110 : vector<16x80xf32>
    %112 = vector.extract_strided_slice %105 {offsets = [16, 0], sizes = [16, 80], strides = [1, 1]} : vector<32x80xf32> to vector<16x80xf32>
    %113 = arith.negf %112 : vector<16x80xf32>
    %114 = math.exp %113 : vector<16x80xf32>
    %cst_91 = arith.constant 1.000000e+00 : f32
    %115 = vector.broadcast %cst_91 : f32 to vector<16x80xf32>
    %116 = arith.addf %115, %114 : vector<16x80xf32>
    %117 = arith.divf %115, %116 : vector<16x80xf32>
    %cst_92 = arith.constant 0.000000e+00 : bf16
    %118 = vector.broadcast %cst_92 : bf16 to vector<16x110xbf16>
    %c0_93 = arith.constant 0 : index
    %c0_94 = arith.constant 0 : index
    %119 = vector.load %arg9[%c0_93, %c0_94] : memref<16x110xbf16, #tpu.memory_space<vmem>>, vector<16x110xbf16>
    tpu.vector_store %arg9[%c0_93, %c0_94], %118 {strides = array<i32>} : memref<16x110xbf16, #tpu.memory_space<vmem>>, vector<16x110xbf16>,
    %120 = arith.mulf %111, %1 : vector<16x80xf32>
    %121 = arith.truncf %120 : vector<16x80xf32> to vector<16x80xbf16>
    %c0_95 = arith.constant 0 : index
    %c11_96 = arith.constant 11 : index
    %122 = vector.load %arg9[%c0_95, %c11_96] : memref<16x110xbf16, #tpu.memory_space<vmem>>, vector<16x80xbf16>
    tpu.vector_store %arg9[%c0_95, %c11_96], %121 {strides = array<i32>} : memref<16x110xbf16, #tpu.memory_space<vmem>>, vector<16x80xbf16>,
    %c0_97 = arith.constant 0 : index
    %c0_98 = arith.constant 0 : index
    %c0_99 = arith.constant 0 : index
    %123 = vector.load %arg6[%c0_97, %c0_98, %c0_99] : memref<9x16x16xbf16, #tpu.memory_space<vmem>>, vector<1x16x16xbf16>
    %124 = vector.shape_cast %123 : vector<1x16x16xbf16> to vector<16x16xbf16>
    %c0_100 = arith.constant 0 : index
    %c0_101 = arith.constant 0 : index
    %125 = vector.load %arg9[%c0_100, %c0_101] : memref<16x110xbf16, #tpu.memory_space<vmem>>, vector<16x80xbf16>
    %cst_102 = arith.constant dense<0.000000e+00> : vector<16x80xf32>
    %126 = tpu.matmul %124, %125, %cst_102 {dimension_numbers = #tpu.dot_dimension_numbers<[1], [0], [0], [1], [0, 0, 1, 1], [], []>} : vector<16x16xbf16>, vector<16x80xbf16>, vector<16x80xf32> -> vector<16x80xf32>
    %127 = arith.addf %102, %126 : vector<16x80xf32>
    %c1_103 = arith.constant 1 : index
    %c0_104 = arith.constant 0 : index
    %c0_105 = arith.constant 0 : index
    %128 = vector.load %arg6[%c1_103, %c0_104, %c0_105] : memref<9x16x16xbf16, #tpu.memory_space<vmem>>, vector<1x16x16xbf16>
    %129 = vector.shape_cast %128 : vector<1x16x16xbf16> to vector<16x16xbf16>
    %c0_106 = arith.constant 0 : index
    %c1_107 = arith.constant 1 : index
    %130 = vector.load %arg9[%c0_106, %c1_107] : memref<16x110xbf16, #tpu.memory_space<vmem>>, vector<16x80xbf16>
    %cst_108 = arith.constant dense<0.000000e+00> : vector<16x80xf32>
    %131 = tpu.matmul %129, %130, %cst_108 {dimension_numbers = #tpu.dot_dimension_numbers<[1], [0], [0], [1], [0, 0, 1, 1], [], []>} : vector<16x16xbf16>, vector<16x80xbf16>, vector<16x80xf32> -> vector<16x80xf32>
    %132 = arith.addf %127, %131 : vector<16x80xf32>
    %c2_109 = arith.constant 2 : index
    %c0_110 = arith.constant 0 : index
    %c0_111 = arith.constant 0 : index
    %133 = vector.load %arg6[%c2_109, %c0_110, %c0_111] : memref<9x16x16xbf16, #tpu.memory_space<vmem>>, vector<1x16x16xbf16>
    %134 = vector.shape_cast %133 : vector<1x16x16xbf16> to vector<16x16xbf16>
    %c0_112 = arith.constant 0 : index
    %c2_113 = arith.constant 2 : index
    %135 = vector.load %arg9[%c0_112, %c2_113] : memref<16x110xbf16, #tpu.memory_space<vmem>>, vector<16x80xbf16>
    %cst_114 = arith.constant dense<0.000000e+00> : vector<16x80xf32>
    %136 = tpu.matmul %134, %135, %cst_114 {dimension_numbers = #tpu.dot_dimension_numbers<[1], [0], [0], [1], [0, 0, 1, 1], [], []>} : vector<16x16xbf16>, vector<16x80xbf16>, vector<16x80xf32> -> vector<16x80xf32>
    %137 = arith.addf %132, %136 : vector<16x80xf32>
    %c3_115 = arith.constant 3 : index
    %c0_116 = arith.constant 0 : index
    %c0_117 = arith.constant 0 : index
    %138 = vector.load %arg6[%c3_115, %c0_116, %c0_117] : memref<9x16x16xbf16, #tpu.memory_space<vmem>>, vector<1x16x16xbf16>
    %139 = vector.shape_cast %138 : vector<1x16x16xbf16> to vector<16x16xbf16>
    %c0_118 = arith.constant 0 : index
    %c10_119 = arith.constant 10 : index
    %140 = vector.load %arg9[%c0_118, %c10_119] : memref<16x110xbf16, #tpu.memory_space<vmem>>, vector<16x80xbf16>
    %cst_120 = arith.constant dense<0.000000e+00> : vector<16x80xf32>
    %141 = tpu.matmul %139, %140, %cst_120 {dimension_numbers = #tpu.dot_dimension_numbers<[1], [0], [0], [1], [0, 0, 1, 1], [], []>} : vector<16x16xbf16>, vector<16x80xbf16>, vector<16x80xf32> -> vector<16x80xf32>
    %142 = arith.addf %137, %141 : vector<16x80xf32>
    %c4_121 = arith.constant 4 : index
    %c0_122 = arith.constant 0 : index
    %c0_123 = arith.constant 0 : index
    %143 = vector.load %arg6[%c4_121, %c0_122, %c0_123] : memref<9x16x16xbf16, #tpu.memory_space<vmem>>, vector<1x16x16xbf16>
    %144 = vector.shape_cast %143 : vector<1x16x16xbf16> to vector<16x16xbf16>
    %c0_124 = arith.constant 0 : index
    %c11_125 = arith.constant 11 : index
    %145 = vector.load %arg9[%c0_124, %c11_125] : memref<16x110xbf16, #tpu.memory_space<vmem>>, vector<16x80xbf16>
    %cst_126 = arith.constant dense<0.000000e+00> : vector<16x80xf32>
    %146 = tpu.matmul %144, %145, %cst_126 {dimension_numbers = #tpu.dot_dimension_numbers<[1], [0], [0], [1], [0, 0, 1, 1], [], []>} : vector<16x16xbf16>, vector<16x80xbf16>, vector<16x80xf32> -> vector<16x80xf32>
    %147 = arith.addf %142, %146 : vector<16x80xf32>
    %c5_127 = arith.constant 5 : index
    %c0_128 = arith.constant 0 : index
    %c0_129 = arith.constant 0 : index
    %148 = vector.load %arg6[%c5_127, %c0_128, %c0_129] : memref<9x16x16xbf16, #tpu.memory_space<vmem>>, vector<1x16x16xbf16>
    %149 = vector.shape_cast %148 : vector<1x16x16xbf16> to vector<16x16xbf16>
    %c0_130 = arith.constant 0 : index
    %c12_131 = arith.constant 12 : index
    %150 = vector.load %arg9[%c0_130, %c12_131] : memref<16x110xbf16, #tpu.memory_space<vmem>>, vector<16x80xbf16>
    %cst_132 = arith.constant dense<0.000000e+00> : vector<16x80xf32>
    %151 = tpu.matmul %149, %150, %cst_132 {dimension_numbers = #tpu.dot_dimension_numbers<[1], [0], [0], [1], [0, 0, 1, 1], [], []>} : vector<16x16xbf16>, vector<16x80xbf16>, vector<16x80xf32> -> vector<16x80xf32>
    %152 = arith.addf %147, %151 : vector<16x80xf32>
    %c6_133 = arith.constant 6 : index
    %c0_134 = arith.constant 0 : index
    %c0_135 = arith.constant 0 : index
    %153 = vector.load %arg6[%c6_133, %c0_134, %c0_135] : memref<9x16x16xbf16, #tpu.memory_space<vmem>>, vector<1x16x16xbf16>
    %154 = vector.shape_cast %153 : vector<1x16x16xbf16> to vector<16x16xbf16>
    %c0_136 = arith.constant 0 : index
    %c20_137 = arith.constant 20 : index
    %155 = vector.load %arg9[%c0_136, %c20_137] : memref<16x110xbf16, #tpu.memory_space<vmem>>, vector<16x80xbf16>
    %cst_138 = arith.constant dense<0.000000e+00> : vector<16x80xf32>
    %156 = tpu.matmul %154, %155, %cst_138 {dimension_numbers = #tpu.dot_dimension_numbers<[1], [0], [0], [1], [0, 0, 1, 1], [], []>} : vector<16x16xbf16>, vector<16x80xbf16>, vector<16x80xf32> -> vector<16x80xf32>
    %157 = arith.addf %152, %156 : vector<16x80xf32>
    %c7_139 = arith.constant 7 : index
    %c0_140 = arith.constant 0 : index
    %c0_141 = arith.constant 0 : index
    %158 = vector.load %arg6[%c7_139, %c0_140, %c0_141] : memref<9x16x16xbf16, #tpu.memory_space<vmem>>, vector<1x16x16xbf16>
    %159 = vector.shape_cast %158 : vector<1x16x16xbf16> to vector<16x16xbf16>
    %c0_142 = arith.constant 0 : index
    %c21_143 = arith.constant 21 : index
    %160 = vector.load %arg9[%c0_142, %c21_143] : memref<16x110xbf16, #tpu.memory_space<vmem>>, vector<16x80xbf16>
    %cst_144 = arith.constant dense<0.000000e+00> : vector<16x80xf32>
    %161 = tpu.matmul %159, %160, %cst_144 {dimension_numbers = #tpu.dot_dimension_numbers<[1], [0], [0], [1], [0, 0, 1, 1], [], []>} : vector<16x16xbf16>, vector<16x80xbf16>, vector<16x80xf32> -> vector<16x80xf32>
    %162 = arith.addf %157, %161 : vector<16x80xf32>
    %c8_145 = arith.constant 8 : index
    %c0_146 = arith.constant 0 : index
    %c0_147 = arith.constant 0 : index
    %163 = vector.load %arg6[%c8_145, %c0_146, %c0_147] : memref<9x16x16xbf16, #tpu.memory_space<vmem>>, vector<1x16x16xbf16>
    %164 = vector.shape_cast %163 : vector<1x16x16xbf16> to vector<16x16xbf16>
    %c0_148 = arith.constant 0 : index
    %c22_149 = arith.constant 22 : index
    %165 = vector.load %arg9[%c0_148, %c22_149] : memref<16x110xbf16, #tpu.memory_space<vmem>>, vector<16x80xbf16>
    %cst_150 = arith.constant dense<0.000000e+00> : vector<16x80xf32>
    %166 = tpu.matmul %164, %165, %cst_150 {dimension_numbers = #tpu.dot_dimension_numbers<[1], [0], [0], [1], [0, 0, 1, 1], [], []>} : vector<16x16xbf16>, vector<16x80xbf16>, vector<16x80xf32> -> vector<16x80xf32>
    %167 = arith.addf %162, %166 : vector<16x80xf32>
    %c0_151 = arith.constant 0 : index
    %c0_152 = arith.constant 0 : index
    %168 = vector.load %arg7[%c0_151, %c0_152] : memref<16x1xf32, #tpu.memory_space<vmem>>, vector<16x1xf32>
    %169 = vector.broadcast %168 : vector<16x1xf32> to vector<16x80xf32>
    %170 = arith.addf %167, %169 : vector<16x80xf32>
    %171 = math.tanh %170 : vector<16x80xf32>
    %cst_153 = arith.constant 1.000000e+00 : f32
    %172 = vector.broadcast %cst_153 : f32 to vector<16x80xf32>
    %173 = arith.subf %172, %117 : vector<16x80xf32>
    %174 = arith.mulf %173, %1 : vector<16x80xf32>
    %175 = arith.mulf %117, %171 : vector<16x80xf32>
    %176 = arith.addf %174, %175 : vector<16x80xf32>
    %c0_154 = arith.constant 0 : index
    %c0_155 = arith.constant 0 : index
    %c0_156 = arith.constant 0 : index
    %177 = vector.load %arg8[%c0_154, %c0_155, %c0_156] : memref<1x16x80xf32, #tpu.memory_space<vmem>>, vector<1x16x80xf32>
    %178 = vector.shape_cast %177 : vector<1x16x80xf32> to vector<16x80xf32>
    %179 = vector.shape_cast %176 : vector<16x80xf32> to vector<1x16x80xf32>
    tpu.vector_store %arg8[%c0_154, %c0_155, %c0_156], %179 {strides = array<i32>} : memref<1x16x80xf32, #tpu.memory_space<vmem>>, vector<1x16x80xf32>,
    return
  }
  func.func @transform_0(%arg0: i32) -> (i32, i32, i32) {
    %c0_i32 = arith.constant 0 : i32
    %c0_i32_0 = arith.constant 0 : i32
    %c0_i32_1 = arith.constant 0 : i32
    return %arg0, %c0_i32, %c0_i32_0 : i32, i32, i32
  }
  func.func @transform_1(%arg0: i32) -> (i32, i32, i32) {
    %c0_i32 = arith.constant 0 : i32
    %c0_i32_0 = arith.constant 0 : i32
    %c0_i32_1 = arith.constant 0 : i32
    return %arg0, %c0_i32, %c0_i32_0 : i32, i32, i32
  }
  func.func @transform_2(%arg0: i32) -> (i32, i32, i32) {
    %c0_i32 = arith.constant 0 : i32
    %c0_i32_0 = arith.constant 0 : i32
    %c0_i32_1 = arith.constant 0 : i32
    %c0_i32_2 = arith.constant 0 : i32
    return %c0_i32, %c0_i32_0, %c0_i32_1 : i32, i32, i32
  }
  func.func @transform_3(%arg0: i32) -> (i32, i32) {
    %c0_i32 = arith.constant 0 : i32
    %c0_i32_0 = arith.constant 0 : i32
    %c0_i32_1 = arith.constant 0 : i32
    return %c0_i32, %c0_i32_0 : i32, i32
  }
  func.func @transform_4(%arg0: i32) -> (i32, i32, i32) {
    %c0_i32 = arith.constant 0 : i32
    %c0_i32_0 = arith.constant 0 : i32
    %c0_i32_1 = arith.constant 0 : i32
    %c0_i32_2 = arith.constant 0 : i32
    return %c0_i32, %c0_i32_0, %c0_i32_1 : i32, i32, i32
  }
  func.func @transform_5(%arg0: i32) -> (i32, i32, i32) {
    %c0_i32 = arith.constant 0 : i32
    %c0_i32_0 = arith.constant 0 : i32
    %c0_i32_1 = arith.constant 0 : i32
    %c0_i32_2 = arith.constant 0 : i32
    return %c0_i32, %c0_i32_0, %c0_i32_1 : i32, i32, i32
  }
  func.func @transform_6(%arg0: i32) -> (i32, i32) {
    %c0_i32 = arith.constant 0 : i32
    %c0_i32_0 = arith.constant 0 : i32
    %c0_i32_1 = arith.constant 0 : i32
    return %c0_i32, %c0_i32_0 : i32, i32
  }
  func.func @transform_7(%arg0: i32) -> (i32, i32, i32) {
    %c0_i32 = arith.constant 0 : i32
    %c0_i32_0 = arith.constant 0 : i32
    %c0_i32_1 = arith.constant 0 : i32
    return %arg0, %c0_i32, %c0_i32_0 : i32, i32, i32
  }
}

</mosaic_0001>

<llo_original>
// kernel: tpu_custom_call.1
$region0: #{tpu_custom_call.1}
  #allocation0 [shape = 'u32[]', space=smem, size = 0x4, offset = 0x4, fixed_abs, tag = 'smem constant byte address 0x4 - core index']
  #allocation1 [shape = 'u32[144,128]{1,0:T(1,128)}', space=vmem, size = 0x12000, scoped, tag = 'internal scratch']
  #allocation2 [shape = 'bf16[16,110]{1,0:T(16,128)(2,1)}', space=vmem, size = 0x1000, scoped, tag = 'scratch operand']
  %s0 = inlined_call_operand.hbm [shape: bf16[2,64,110], index: 0, kind: input, shape index: {}]
  %s1 = inlined_call_operand.vmem [shape: f32[2,16,80], index: 1, kind: input, shape index: {}]
  %s2 = inlined_call_operand.hbm [shape: bf16[9,32,64], index: 2, kind: input, shape index: {}]
  %s3 = inlined_call_operand.vmem [shape: f32[32,1], index: 3, kind: input, shape index: {}]
  %s4 = inlined_call_operand.hbm [shape: bf16[9,16,48], index: 4, kind: input, shape index: {}]
  %s5 = inlined_call_operand.hbm [shape: bf16[9,16,16], index: 5, kind: input, shape index: {}]
  %s6 = inlined_call_operand.vmem [shape: f32[16,1], index: 6, kind: input, shape index: {}]
  %s7 = inlined_call_operand.hbm [shape: f32[2,16,80], index: 7, kind: output, shape index: {}]
  %s8 = sld [smem:[#allocation0]]
  $region77: #{tpu_custom_call.1} parent=0
    _
  %s10 = ssub.s32 1, %s8
  %s11 = scalar_select 0, %s10, %s8
  $region1: #{tpu_custom_call.1} parent=0
    #allocation3 [shape = 'u8[32768]{0}', space=vmem, size = 0x8000, scoped, tag = 'input window, operand 0']
    #allocation4 [shape = 's32[2]{0}', space=sflag, size = 0x8, scoped, tag = 'scoped memory for tpu_custom_call.1']
    #allocation5 [shape = 's32[2]{0}', space=sflag, size = 0x8, scoped, tag = 'scoped memory for tpu_custom_call.1']
    #allocation6 [shape = 'u8[73728]{0}', space=vmem, size = 0x12000, scoped, tag = 'input window, operand 2, single buffered']
    #allocation7 [shape = 's32[1]{0}', space=sflag, size = 0x4, scoped, tag = 'scoped memory for tpu_custom_call.1']
    #allocation8 [shape = 'u8[36864]{0}', space=vmem, size = 0x9000, scoped, tag = 'input window, operand 4, single buffered']
    #allocation9 [shape = 'u8[36864]{0}', space=vmem, size = 0x9000, scoped, tag = 'input window, operand 5, single buffered']
    #allocation10 [shape = 's32[1]{0}', space=sflag, size = 0x4, scoped, tag = 'scoped memory for tpu_custom_call.1']
    #allocation11 [shape = 'u8[16384]{0}', space=vmem, size = 0x4000, scoped, tag = 'output window, operand 0']
    %12 = vsyncpa [#allocation4], 0
    %s13 = scalar_lea.sflag [#allocation4], 1
    %14 = vsyncpa %s13, 0
    %15 = vsyncpa [#allocation7], 0
    %16 = vsyncpa [#allocation10], 0
    %17 = vsyncpa [#allocation5], 0
    %s18 = scalar_lea.sflag [#allocation5], 1
    %19 = vsyncpa %s18, 0
    loop: start=0, step=1, limit=4
    $region2: #{tpu_custom_call.1} parent=1 // loop_pre_header
      _
    $region3: #{tpu_custom_call.1} parent=1 // loop_header
      %s21 = sphi 0, %s25
      %p22 = scmp.ge.s32.totalorder %s21, 4
      %s31 = sphi 0, %s33
      %s34 = sphi 0, %s31
      %s35 = sphi 0, %s34
      %s51 = sphi 0, %s35
      %s57 = sphi 0, %s59
      %s60 = sphi 0, %s57
      %s61 = sphi 0, %s60
      %s77 = sphi 0, %s61
      %s81 = sphi 0, %s81
      %s83 = sphi 0, %s81
      %s84 = sphi 0, %s83
      %s98 = sphi 0, %s84
      %s102 = sphi 0, %s102
      %s104 = sphi 0, %s102
      %s105 = sphi 0, %s104
      %s119 = sphi 0, %s105
      %s123 = sphi 0, %s123
      %s125 = sphi 0, %s123
      %s126 = sphi 0, %s125
      %s140 = sphi 0, %s126
      %s144 = sphi 0, %s144
      %s146 = sphi 0, %s144
      %s147 = sphi 0, %s146
      %s161 = sphi 0, %s147
      %s165 = sphi 0, %s165
      %s167 = sphi 0, %s165
      %s168 = sphi 0, %s167
      %s182 = sphi 0, %s168
      %s188 = sphi 0, %s190
      %s191 = sphi 0, %s188
      %s192 = sphi 0, %s191
      %s208 = sphi 0, %s192
    $region4: #{tpu_custom_call.1} parent=1 // loop_header_branch
      %24 = sbr.rel (%p22) target = $region8
    $region5: #{tpu_custom_call.1} parent=1 // loop_body
      %s26 = ssub.s32 %s21, 1
      %s27 = ssub.s32 %s21, 2
      %s28 = sadd.s32 %s21, 1
      %s29 = ssub.s32 %s21, %s28
      %p30 = scmp.eq.s32.totalorder %s29, 0
      %s32 = sadd.s32 %s31, 1
      %s33 = scalar_select %p30, %s31, %s32
      %p36 = pneg %p30
      %p37 = scmp.eq.s32.totalorder %s21, 1
      %p38 = por %p36, %p37
      %p39 = scmp.ne.s32.totalorder %s31, %s34
      %p40 = scmp.eq.s32.totalorder %s21, 0
      %p41 = por %p39, %p40
      %p42 = scmp.ne.s32.totalorder %s31, %s34
      %p43 = scmp.eq.s32.totalorder %s26, 1
      %p44 = por %p42, %p43
      %p45 = scmp.ne.s32.totalorder %s34, %s35
      %p46 = scmp.eq.s32.totalorder %s26, 0
      %p47 = por %p45, %p46
      %p48 = scmp.ne.s32.totalorder %s34, %s35
      %p49 = scmp.eq.s32.totalorder %s27, 1
      %p50 = por %p48, %p49
      %p52 = scmp.ne.s32.totalorder %s35, %s51
      %p53 = scmp.eq.s32.totalorder %s27, 0
      %p54 = por %p52, %p53
      %s55 = ssub.s32 %s21, %s28
      %p56 = scmp.eq.s32.totalorder %s55, 0
      %s58 = sadd.s32 %s57, 1
      %s59 = scalar_select %p56, %s57, %s58
      %p62 = pneg %p56
      %p63 = scmp.eq.s32.totalorder %s21, 1
      %p64 = por %p62, %p63
      %p65 = scmp.ne.s32.totalorder %s57, %s60
      %p66 = scmp.eq.s32.totalorder %s21, 0
      %p67 = por %p65, %p66
      %p68 = scmp.ne.s32.totalorder %s57, %s60
      %p69 = scmp.eq.s32.totalorder %s26, 1
      %p70 = por %p68, %p69
      %p71 = scmp.ne.s32.totalorder %s60, %s61
      %p72 = scmp.eq.s32.totalorder %s26, 0
      %p73 = por %p71, %p72
      %p74 = scmp.ne.s32.totalorder %s60, %s61
      %p75 = scmp.eq.s32.totalorder %s27, 1
      %p76 = por %p74, %p75
      %p78 = scmp.ne.s32.totalorder %s61, %s77
      %p79 = scmp.eq.s32.totalorder %s27, 0
      %p80 = por %p78, %p79
      %s82 = sadd.s32 %s81, 1
      %p85 = scmp.eq.s32.totalorder %s21, 1
      %p86 = scmp.ne.s32.totalorder %s81, %s83
      %p87 = scmp.eq.s32.totalorder %s21, 0
      %p88 = por %p86, %p87
      %p89 = scmp.ne.s32.totalorder %s81, %s83
      %p90 = scmp.eq.s32.totalorder %s26, 1
      %p91 = por %p89, %p90
      %p92 = scmp.ne.s32.totalorder %s83, %s84
      %p93 = scmp.eq.s32.totalorder %s26, 0
      %p94 = por %p92, %p93
      %p95 = scmp.ne.s32.totalorder %s83, %s84
      %p96 = scmp.eq.s32.totalorder %s27, 1
      %p97 = por %p95, %p96
      %p99 = scmp.ne.s32.totalorder %s84, %s98
      %p100 = scmp.eq.s32.totalorder %s27, 0
      %p101 = por %p99, %p100
      %s103 = sadd.s32 %s102, 1
      %p106 = scmp.eq.s32.totalorder %s21, 1
      %p107 = scmp.ne.s32.totalorder %s102, %s104
      %p108 = scmp.eq.s32.totalorder %s21, 0
      %p109 = por %p107, %p108
      %p110 = scmp.ne.s32.totalorder %s102, %s104
      %p111 = scmp.eq.s32.totalorder %s26, 1
      %p112 = por %p110, %p111
      %p113 = scmp.ne.s32.totalorder %s104, %s105
      %p114 = scmp.eq.s32.totalorder %s26, 0
      %p115 = por %p113, %p114
      %p116 = scmp.ne.s32.totalorder %s104, %s105
      %p117 = scmp.eq.s32.totalorder %s27, 1
      %p118 = por %p116, %p117
      %p120 = scmp.ne.s32.totalorder %s105, %s119
      %p121 = scmp.eq.s32.totalorder %s27, 0
      %p122 = por %p120, %p121
      %s124 = sadd.s32 %s123, 1
      %p127 = scmp.eq.s32.totalorder %s21, 1
      %p128 = scmp.ne.s32.totalorder %s123, %s125
      %p129 = scmp.eq.s32.totalorder %s21, 0
      %p130 = por %p128, %p129
      %p131 = scmp.ne.s32.totalorder %s123, %s125
      %p132 = scmp.eq.s32.totalorder %s26, 1
      %p133 = por %p131, %p132
      %p134 = scmp.ne.s32.totalorder %s125, %s126
      %p135 = scmp.eq.s32.totalorder %s26, 0
      %p136 = por %p134, %p135
      %p137 = scmp.ne.s32.totalorder %s125, %s126
      %p138 = scmp.eq.s32.totalorder %s27, 1
      %p139 = por %p137, %p138
      %p141 = scmp.ne.s32.totalorder %s126, %s140
      %p142 = scmp.eq.s32.totalorder %s27, 0
      %p143 = por %p141, %p142
      %s145 = sadd.s32 %s144, 1
      %p148 = scmp.eq.s32.totalorder %s21, 1
      %p149 = scmp.ne.s32.totalorder %s144, %s146
      %p150 = scmp.eq.s32.totalorder %s21, 0
      %p151 = por %p149, %p150
      %p152 = scmp.ne.s32.totalorder %s144, %s146
      %p153 = scmp.eq.s32.totalorder %s26, 1
      %p154 = por %p152, %p153
      %p155 = scmp.ne.s32.totalorder %s146, %s147
      %p156 = scmp.eq.s32.totalorder %s26, 0
      %p157 = por %p155, %p156
      %p158 = scmp.ne.s32.totalorder %s146, %s147
      %p159 = scmp.eq.s32.totalorder %s27, 1
      %p160 = por %p158, %p159
      %p162 = scmp.ne.s32.totalorder %s147, %s161
      %p163 = scmp.eq.s32.totalorder %s27, 0
      %p164 = por %p162, %p163
      %s166 = sadd.s32 %s165, 1
      %p169 = scmp.eq.s32.totalorder %s21, 1
      %p170 = scmp.ne.s32.totalorder %s165, %s167
      %p171 = scmp.eq.s32.totalorder %s21, 0
      %p172 = por %p170, %p171
      %p173 = scmp.ne.s32.totalorder %s165, %s167
      %p174 = scmp.eq.s32.totalorder %s26, 1
      %p175 = por %p173, %p174
      %p176 = scmp.ne.s32.totalorder %s167, %s168
      %p177 = scmp.eq.s32.totalorder %s26, 0
      %p178 = por %p176, %p177
      %p179 = scmp.ne.s32.totalorder %s167, %s168
      %p180 = scmp.eq.s32.totalorder %s27, 1
      %p181 = por %p179, %p180
      %p183 = scmp.ne.s32.totalorder %s168, %s182
      %p184 = scmp.eq.s32.totalorder %s27, 0
      %p185 = por %p183, %p184
      %s186 = ssub.s32 %s21, %s28
      %p187 = scmp.eq.s32.totalorder %s186, 0
      %s189 = sadd.s32 %s188, 1
      %s190 = scalar_select %p187, %s188, %s189
      %p193 = pneg %p187
      %p194 = scmp.eq.s32.totalorder %s21, 1
      %p195 = por %p193, %p194
      %p196 = scmp.ne.s32.totalorder %s188, %s191
      %p197 = scmp.eq.s32.totalorder %s21, 0
      %p198 = por %p196, %p197
      %p199 = scmp.ne.s32.totalorder %s188, %s191
      %p200 = scmp.eq.s32.totalorder %s26, 1
      %p201 = por %p199, %p200
      %p202 = scmp.ne.s32.totalorder %s191, %s192
      %p203 = scmp.eq.s32.totalorder %s26, 0
      %p204 = por %p202, %p203
      %p205 = scmp.ne.s32.totalorder %s191, %s192
      %p206 = scmp.eq.s32.totalorder %s27, 1
      %p207 = por %p205, %p206
      %p209 = scmp.ne.s32.totalorder %s192, %s208
      %p210 = scmp.eq.s32.totalorder %s27, 0
      %p211 = por %p209, %p210
      %p212 = scmp.le.s32.totalorder 1, %s21
      %p213 = scmp.lt.s32.totalorder %s21, 3
      %p214 = pnand %p212, %p213
      %p215 = pneg %p214
      // Predicated region
      $region9: #{tpu_custom_call.1} parent=5 // pred_check
        _
      $region10: #{tpu_custom_call.1} parent=5 // pred_check_branch
        %217 = sbr.rel (%p214) target = $region12
      $region11: #{tpu_custom_call.1} parent=5 // pred_region
        %s218 = ssub.s32 %s21, 1
        // Predicated region
        $region13: #{tpu_custom_call.1} parent=11 // pred_check
          %p219 = pneg %p94
        $region14: #{tpu_custom_call.1} parent=11 // pred_check_branch
          %221 = sbr.rel (%p219) target = $region16
        $region15: #{tpu_custom_call.1} parent=11 // pred_region
          %s223 = ssub.s32 2304, 2304
          %224 = vsyncadd [#allocation7], %s223
          %s225 = sshll.u32 [#allocation6], 4
          %s226 = int_to_ptr.vmem [resolvable:$true] %s225
          %231 = dma.hbm_to_vmem [thread:$0]  %s2, 2304, %s226, [#allocation7], 64, 64, 4
        $region16: #{tpu_custom_call.1} parent=11 // pred_fallthru
          _
        // Predicated region
        $region17: #{tpu_custom_call.1} parent=11 // pred_check
          %p232 = pneg %p115
        $region18: #{tpu_custom_call.1} parent=11 // pred_check_branch
          %234 = sbr.rel (%p232) target = $region20
        $region19: #{tpu_custom_call.1} parent=11 // pred_region
          _
        $region20: #{tpu_custom_call.1} parent=11 // pred_fallthru
          _
        // Predicated region
        $region21: #{tpu_custom_call.1} parent=11 // pred_check
          %p235 = pneg %p136
        $region22: #{tpu_custom_call.1} parent=11 // pred_check_branch
          %237 = sbr.rel (%p235) target = $region24
        $region23: #{tpu_custom_call.1} parent=11 // pred_region
          %s239 = ssub.s32 1152, 1152
          %240 = vsyncadd [#allocation7], %s239
          %s241 = sshll.u32 [#allocation8], 4
          %s242 = int_to_ptr.vmem [resolvable:$true] %s241
          %247 = dma.hbm_to_vmem [thread:$0]  %s4, 1152, %s242, [#allocation7], 64, 64, 4
        $region24: #{tpu_custom_call.1} parent=11 // pred_fallthru
          _
        // Predicated region
        $region25: #{tpu_custom_call.1} parent=11 // pred_check
          %p248 = pneg %p157
        $region26: #{tpu_custom_call.1} parent=11 // pred_check_branch
          %250 = sbr.rel (%p248) target = $region28
        $region27: #{tpu_custom_call.1} parent=11 // pred_region
          %s252 = ssub.s32 1152, 1152
          %253 = vsyncadd [#allocation10], %s252
          %s254 = sshll.u32 [#allocation9], 4
          %s255 = int_to_ptr.vmem [resolvable:$true] %s254
          %260 = dma.hbm_to_vmem [thread:$0]  %s5, 1152, %s255, [#allocation10], 64, 64, 4
        $region28: #{tpu_custom_call.1} parent=11 // pred_fallthru
          _
        // Predicated region
        $region29: #{tpu_custom_call.1} parent=11 // pred_check
          %p261 = pneg %p178
        $region30: #{tpu_custom_call.1} parent=11 // pred_check_branch
          %263 = sbr.rel (%p261) target = $region32
        $region31: #{tpu_custom_call.1} parent=11 // pred_region
          _
        $region32: #{tpu_custom_call.1} parent=11 // pred_fallthru
          _
      $region12: #{tpu_custom_call.1} parent=5 // pred_fallthru
        _
      %p264 = scmp.lt.s32.totalorder %s21, 2
      // Predicated region
      $region33: #{tpu_custom_call.1} parent=5 // pred_check
        %p265 = pneg %p264
      $region34: #{tpu_custom_call.1} parent=5 // pred_check_branch
        %267 = sbr.rel (%p265) target = $region36
      $region35: #{tpu_custom_call.1} parent=5 // pred_region
        // Predicated region
        $region37: #{tpu_custom_call.1} parent=35 // pred_check
          %p268 = pneg %p41
        $region38: #{tpu_custom_call.1} parent=35 // pred_check_branch
          %270 = sbr.rel (%p268) target = $region40
        $region39: #{tpu_custom_call.1} parent=35 // pred_region
          %s271 = sand.u32 %s31, 1
          %s272 = scalar_lea.sflag [#allocation4], %s271
          %s273 = sand.u32 %s31, 1
          %s274 = smul.addr %s273, 32
          %s275 = scalar_lea.vmem [#allocation3], %s274
          %s277 = ssub.s32 512, 512
          %278 = vsyncadd %s272, %s277
          %s279 = smul.addr %s21, 8
          %s280 = smul.addr %s279, 64
          %s281 = scalar_lea.hbm %s0, %s280
          %s282 = sshll.u32 %s275, 4
          %s283 = int_to_ptr.vmem [resolvable:$true] %s282
          %288 = dma.hbm_to_vmem [thread:$0]  %s281, 512, %s283, %s272, 64, 64, 4
        $region40: #{tpu_custom_call.1} parent=35 // pred_fallthru
          _
        // Predicated region
        $region41: #{tpu_custom_call.1} parent=35 // pred_check
          %p289 = pneg %p67
        $region42: #{tpu_custom_call.1} parent=35 // pred_check_branch
          %291 = sbr.rel (%p289) target = $region44
        $region43: #{tpu_custom_call.1} parent=35 // pred_region
          %p292 = scmp.lt.s32.totalorder %s21, 1
          %s293 = scalar_select %p292, %s21, 1
          %s294 = smul.addr %s293, 2
          %s295 = smul.addr %s294, 8
          %s296 = scalar_lea.vmem %s1, %s295
        $region44: #{tpu_custom_call.1} parent=35 // pred_fallthru
          _
      $region36: #{tpu_custom_call.1} parent=5 // pred_fallthru
        _
      %p297 = scmp.le.s32.totalorder 1, %s21
      %p298 = scmp.lt.s32.totalorder %s21, 3
      %p299 = pnand %p297, %p298
      %p300 = pneg %p299
      // Predicated region
      $region45: #{tpu_custom_call.1} parent=5 // pred_check
        _
      $region46: #{tpu_custom_call.1} parent=5 // pred_check_branch
        %302 = sbr.rel (%p299) target = $region48
      $region47: #{tpu_custom_call.1} parent=5 // pred_region
        %s303 = ssub.s32 %s21, 1
        %s304 = sand.u32 %s34, 1
        %s305 = scalar_lea.sflag [#allocation4], %s304
        %s306 = sand.u32 %s34, 1
        %s307 = smul.addr %s306, 32
        %s308 = scalar_lea.vmem [#allocation3], %s307
        // Predicated region
        $region49: #{tpu_custom_call.1} parent=47 // pred_check
          %p309 = pneg %p47
        $region50: #{tpu_custom_call.1} parent=47 // pred_check_branch
          %311 = sbr.rel (%p309) target = $region52
        $region51: #{tpu_custom_call.1} parent=47 // pred_region
          %312 = dma.done %s305, 512
        $region52: #{tpu_custom_call.1} parent=47 // pred_fallthru
          _
        // Predicated region
        $region53: #{tpu_custom_call.1} parent=47 // pred_check
          %p313 = pneg %p94
        $region54: #{tpu_custom_call.1} parent=47 // pred_check_branch
          %315 = sbr.rel (%p313) target = $region56
        $region55: #{tpu_custom_call.1} parent=47 // pred_region
          %316 = dma.done [#allocation7], 2304
        $region56: #{tpu_custom_call.1} parent=47 // pred_fallthru
          _
        // Predicated region
        $region57: #{tpu_custom_call.1} parent=47 // pred_check
          %p317 = pneg %p136
        $region58: #{tpu_custom_call.1} parent=47 // pred_check_branch
          %319 = sbr.rel (%p317) target = $region60
        $region59: #{tpu_custom_call.1} parent=47 // pred_region
          %320 = dma.done [#allocation7], 1152
        $region60: #{tpu_custom_call.1} parent=47 // pred_fallthru
          _
        // Predicated region
        $region61: #{tpu_custom_call.1} parent=47 // pred_check
          %p321 = pneg %p157
        $region62: #{tpu_custom_call.1} parent=47 // pred_check_branch
          %323 = sbr.rel (%p321) target = $region64
        $region63: #{tpu_custom_call.1} parent=47 // pred_region
          %324 = dma.done [#allocation10], 1152
        $region64: #{tpu_custom_call.1} parent=47 // pred_fallthru
          _
        %s325 = sand.u32 %s34, 1
        %s326 = scalar_lea.sflag [#allocation4], %s325
        %s327 = sand.u32 %s34, 1
        %s328 = smul.addr %s327, 32
        %s329 = scalar_lea.vmem [#allocation3], %s328
        %p330 = pneg %p47
        %p331 = pneg %p44
        %p332 = scmp.lt.s32.totalorder %s26, 1
        %s333 = scalar_select %p332, %s26, 1
        %s334 = smul.addr %s333, 2
        %s335 = smul.addr %s334, 8
        %s336 = scalar_lea.vmem %s1, %s335
        %p337 = pneg %p73
        %p338 = pneg %p70
        %p339 = pneg %p94
        %p340 = pneg %p91
        %p341 = pneg %p115
        %p342 = pneg %p112
        %p343 = pneg %p136
        %p344 = pneg %p133
        %p345 = pneg %p157
        %p346 = pneg %p154
        %p347 = pneg %p178
        %p348 = pneg %p175
        %p349 = pneg %p204
        %p350 = pneg %p201
        %s351 = sand.u32 %s191, 1
        %s352 = scalar_lea.sflag [#allocation5], %s351
        %s353 = sand.u32 %s191, 1
        %s354 = smul.addr %s353, 16
        %s355 = scalar_lea.vmem [#allocation11], %s354
        %p356 = scmp.lt.s32.totalorder %s26, 1
        %s357 = scalar_select %p356, %s26, 1
        %s358 = smul.addr %s357, 2
        %s359 = smul.addr %s358, 8
        %s360 = scalar_lea.vmem %s1, %s359
        %v362 = vld [vmem:[%s360] sm:$0xff]
        %v363 = vld [vmem:[%s360 + $0x8] sm:$0xff]
        %v364 = vld [vmem:[%s308] sm:$0xf]
        %v365 = vld [vmem:[%s308 + $0x4] sm:$0xf]
        %v366 = vld [vmem:[%s308 + $0x8] sm:$0xf]
        %v367 = vld [vmem:[%s308 + $0xc] sm:$0xf]
        %v368 = vld [vmem:[%s308 + $0x10] sm:$0xf]
        %v369 = vld [vmem:[%s308 + $0x14] sm:$0xf]
        %v370 = vld [vmem:[%s308 + $0x18] sm:$0xf]
        %v371 = vld [vmem:[%s308 + $0x1c] sm:$0xf]
        %v372 = vld [vmem:[#allocation6] sm:$0xf]
        %v373 = vld [vmem:[#allocation6 + $0x4] sm:$0xf]
        %v374 = vld [vmem:[#allocation6 + $0x8] sm:$0xf]
        %v375 = vld [vmem:[#allocation6 + $0xc] sm:$0xf]
        %v376 = vld [vmem:[#allocation8] sm:$0xf]
        %v377 = vld [vmem:[#allocation8 + $0x4] sm:$0xf]
        %s378 = scalar_lea.vmem [#allocation6], 16
        %v379 = vld [vmem:[%s378] sm:$0xf]
        %v380 = vld [vmem:[%s378 + $0x4] sm:$0xf]
        %v381 = vld [vmem:[%s378 + $0x8] sm:$0xf]
        %v382 = vld [vmem:[%s378 + $0xc] sm:$0xf]
        %v387 = vunpack.c.l.b16 %v379
        %v388 = vunpack.c.l.b16 %v380
        %v389 = vunpack.c.l.b16 %v381
        %v390 = vunpack.c.l.b16 %v382
        %v391 = vpack.c.b16 %v388, %v387
        %v392 = vpack.c.b16 %v390, %v389
        %v401 = vunpack.c.l.b16 %v364
        %v402 = vunpack.c.l.b16 %v365
        %v403 = vunpack.c.l.b16 %v366
        %v404 = vunpack.c.l.b16 %v367
        %v405 = vunpack.c.l.b16 %v368
        %v406 = vunpack.c.l.b16 %v369
        %v407 = vunpack.c.l.b16 %v370
        %v408 = vunpack.c.l.b16 %v371
        %v409 = vpack.c.b16 %v402, %v401
        %v410 = vpack.c.b16 %v404, %v403
        %v411 = vpack.c.b16 %v406, %v405
        %v412 = vpack.c.b16 %v408, %v407
        %413 = vrot.lane.b32.xlu0 %v409, 127
        %v414 = vpop.permute.xlu0 %413
        %415 = vrot.lane.b32.xlu0 %v410, 127
        %v416 = vpop.permute.xlu0 %415
        %417 = vrot.lane.b32.xlu0 %v411, 127
        %v418 = vpop.permute.xlu0 %417
        %419 = vrot.lane.b32.xlu0 %v412, 127
        %v420 = vpop.permute.xlu0 %419
        %vm425 = vcmask 523264
        %v427 = vsel %vm425, %v391, 0
        %v430 = vsel %vm425, %v392, 0
        %432 = vmatprep.subr.bf16.mxu0 0
        %433 = vmatpush1.bf16.msra.mxu0 %v414
        %434 = vmatprep.subr.bf16.mxu0 0
        %435 = vmatpush1.bf16.msra.mxu0 %v416
        %436 = vmatprep.subr.bf16.mxu0 0
        %437 = vmatpush1.bf16.msra.mxu0 %v418
        %438 = vmatprep.subr.bf16.mxu0 0
        %439 = vmatpush1.bf16.msra.mxu0 %v420
        %440 = vmatprep.subr.bf16.mxu0 0
        %441 = vmatpush1.bf16.msra.mxu0 0
        %442 = vmatprep.subr.bf16.mxu0 0
        %443 = vmatpush1.bf16.msra.mxu0 0
        %444 = vmatprep.subr.bf16.mxu0 0
        %445 = vmatpush1.bf16.msra.mxu0 0
        %446 = vmatprep.subr.bf16.mxu0 0
        %447 = vmatpush1.bf16.msra.mxu0 0
        %448 = vmatprep.subr.bf16.mxu0 0
        %449 = vmatpush1.bf16.msra.mxu0 0
        %450 = vmatprep.subr.bf16.mxu0 0
        %451 = vmatpush1.bf16.msra.mxu0 0
        %452 = vmatprep.subr.bf16.mxu0 0
        %453 = vmatpush1.bf16.msra.mxu0 0
        %454 = vmatprep.subr.bf16.mxu0 0
        %455 = vmatpush1.bf16.msra.mxu0 0
        %456 = vmatprep.subr.bf16.mxu0 0
        %457 = vmatpush1.bf16.msra.mxu0 0
        %458 = vmatprep.subr.bf16.mxu0 0
        %459 = vmatpush1.bf16.msra.mxu0 0
        %460 = vmatprep.subr.bf16.mxu0 0
        %461 = vmatpush1.bf16.msra.mxu0 0
        %462 = vmatprep.subr.bf16.mxu0 0
        %463 = vmatpush1.bf16.msra.mxu0 0
        %464 = vmatprep.mubr.bf16.mxu0 0
        %465 = vmatmul.mubr.bf16.gmra.mrb[0].mxu0 %v427
        %v466 = vpop.f32.mrb[0].mxu0
        %v467 = vadd.f32 0.0, %v466
        %v468 = vpop.f32.mrb[0].mxu0
        %v469 = vpop.f32.mrb[0].mxu0
        %v470 = vadd.f32 0.0, %v469
        %v471 = vpop.f32.mrb[0].mxu0
        %472 = vmatprep.mubr.bf16.mxu0 0
        %473 = vmatmul.mubr.bf16.gmra.mrb[0].mxu0 %v430
        %v474 = vpop.f32.mrb[0].mxu0
        %v475 = vadd.f32 0.0, %v474
        %v476 = vpop.f32.mrb[0].mxu0
        %v477 = vpop.f32.mrb[0].mxu0
        %v478 = vadd.f32 0.0, %v477
        %v479 = vpop.f32.mrb[0].mxu0
        %480 = vdwg.mxu0
        %v485 = vunpack.c.l.b16 %v372
        %v486 = vunpack.c.l.b16 %v373
        %v487 = vunpack.c.l.b16 %v374
        %v488 = vunpack.c.l.b16 %v375
        %v489 = vpack.c.b16 %v486, %v485
        %v490 = vpack.c.b16 %v488, %v487
        %v496 = vsel %vm425, %v489, 0
        %v499 = vsel %vm425, %v490, 0
        %501 = vmatprep.subr.bf16.mxu0 0
        %502 = vmatpush1.bf16.msra.mxu0 %v409
        %503 = vmatprep.subr.bf16.mxu0 0
        %504 = vmatpush1.bf16.msra.mxu0 %v410
        %505 = vmatprep.subr.bf16.mxu0 0
        %506 = vmatpush1.bf16.msra.mxu0 %v411
        %507 = vmatprep.subr.bf16.mxu0 0
        %508 = vmatpush1.bf16.msra.mxu0 %v412
        %509 = vmatprep.subr.bf16.mxu0 0
        %510 = vmatpush1.bf16.msra.mxu0 0
        %511 = vmatprep.subr.bf16.mxu0 0
        %512 = vmatpush1.bf16.msra.mxu0 0
        %513 = vmatprep.subr.bf16.mxu0 0
        %514 = vmatpush1.bf16.msra.mxu0 0
        %515 = vmatprep.subr.bf16.mxu0 0
        %516 = vmatpush1.bf16.msra.mxu0 0
        %517 = vmatprep.subr.bf16.mxu0 0
        %518 = vmatpush1.bf16.msra.mxu0 0
        %519 = vmatprep.subr.bf16.mxu0 0
        %520 = vmatpush1.bf16.msra.mxu0 0
        %521 = vmatprep.subr.bf16.mxu0 0
        %522 = vmatpush1.bf16.msra.mxu0 0
        %523 = vmatprep.subr.bf16.mxu0 0
        %524 = vmatpush1.bf16.msra.mxu0 0
        %525 = vmatprep.subr.bf16.mxu0 0
        %526 = vmatpush1.bf16.msra.mxu0 0
        %527 = vmatprep.subr.bf16.mxu0 0
        %528 = vmatpush1.bf16.msra.mxu0 0
        %529 = vmatprep.subr.bf16.mxu0 0
        %530 = vmatpush1.bf16.msra.mxu0 0
        %531 = vmatprep.subr.bf16.mxu0 0
        %532 = vmatpush1.bf16.msra.mxu0 0
        %533 = vmatprep.mubr.bf16.mxu0 0
        %534 = vmatmul.mubr.bf16.gmra.mrb[0].mxu0 %v496
        %v535 = vpop.f32.mrb[0].mxu0
        %v536 = vadd.f32 %v467, %v535
        %v537 = vpop.f32.mrb[0].mxu0
        %v538 = vpop.f32.mrb[0].mxu0
        %v539 = vadd.f32 %v470, %v538
        %v540 = vpop.f32.mrb[0].mxu0
        %541 = vmatprep.mubr.bf16.mxu0 0
        %542 = vmatmul.mubr.bf16.gmra.mrb[0].mxu0 %v499
        %v543 = vpop.f32.mrb[0].mxu0
        %v544 = vadd.f32 %v475, %v543
        %v545 = vpop.f32.mrb[0].mxu0
        %v546 = vpop.f32.mrb[0].mxu0
        %v547 = vadd.f32 %v478, %v546
        %v548 = vpop.f32.mrb[0].mxu0
        %549 = vdwg.mxu0
        %s550 = scalar_lea.vmem [#allocation8], 8
        %v551 = vld [vmem:[%s550] sm:$0xf]
        %v552 = vld [vmem:[%s550 + $0x4] sm:$0xf]
        %v555 = vunpack.c.l.b16 %v551
        %v556 = vunpack.c.l.b16 %v552
        %v557 = vpack.c.b16 %v556, %v555
        %vm558 = vcmask 392192
        %v560 = vsel %vm558, %v557, 0
        %562 = vmatprep.subr.bf16.mxu0 0
        %563 = vmatpush1.bf16.msra.mxu0 %v414
        %564 = vmatprep.subr.bf16.mxu0 0
        %565 = vmatpush1.bf16.msra.mxu0 %v416
        %566 = vmatprep.subr.bf16.mxu0 0
        %567 = vmatpush1.bf16.msra.mxu0 %v418
        %568 = vmatprep.subr.bf16.mxu0 0
        %569 = vmatpush1.bf16.msra.mxu0 0
        %570 = vmatprep.subr.bf16.mxu0 0
        %571 = vmatpush1.bf16.msra.mxu0 0
        %572 = vmatprep.subr.bf16.mxu0 0
        %573 = vmatpush1.bf16.msra.mxu0 0
        %574 = vmatprep.subr.bf16.mxu0 0
        %575 = vmatpush1.bf16.msra.mxu0 0
        %576 = vmatprep.subr.bf16.mxu0 0
        %577 = vmatpush1.bf16.msra.mxu0 0
        %578 = vmatprep.subr.bf16.mxu0 0
        %579 = vmatpush1.bf16.msra.mxu0 0
        %580 = vmatprep.subr.bf16.mxu0 0
        %581 = vmatpush1.bf16.msra.mxu0 0
        %582 = vmatprep.subr.bf16.mxu0 0
        %583 = vmatpush1.bf16.msra.mxu0 0
        %584 = vmatprep.subr.bf16.mxu0 0
        %585 = vmatpush1.bf16.msra.mxu0 0
        %586 = vmatprep.subr.bf16.mxu0 0
        %587 = vmatpush1.bf16.msra.mxu0 0
        %588 = vmatprep.subr.bf16.mxu0 0
        %589 = vmatpush1.bf16.msra.mxu0 0
        %590 = vmatprep.subr.bf16.mxu0 0
        %591 = vmatpush1.bf16.msra.mxu0 0
        %592 = vmatprep.subr.bf16.mxu0 0
        %593 = vmatpush1.bf16.msra.mxu0 0
        %594 = vmatprep.mubr.bf16.mxu0 0
        %595 = vmatmul.mubr.bf16.gmra.mrb[0].mxu0 %v560
        %v596 = vpop.f32.mrb[0].mxu0
        %v597 = vadd.f32 0.0, %v596
        %v598 = vpop.f32.mrb[0].mxu0
        %v599 = vpop.f32.mrb[0].mxu0
        %v600 = vadd.f32 0.0, %v599
        %v601 = vpop.f32.mrb[0].mxu0
        %602 = vdwg.mxu0
        %v605 = vunpack.c.l.b16 %v376
        %v606 = vunpack.c.l.b16 %v377
        %v607 = vpack.c.b16 %v606, %v605
        %v609 = vsel %vm558, %v607, 0
        %611 = vmatprep.subr.bf16.mxu0 0
        %612 = vmatpush1.bf16.msra.mxu0 %v409
        %613 = vmatprep.subr.bf16.mxu0 0
        %614 = vmatpush1.bf16.msra.mxu0 %v410
        %615 = vmatprep.subr.bf16.mxu0 0
        %616 = vmatpush1.bf16.msra.mxu0 %v411
        %617 = vmatprep.subr.bf16.mxu0 0
        %618 = vmatpush1.bf16.msra.mxu0 0
        %619 = vmatprep.subr.bf16.mxu0 0
        %620 = vmatpush1.bf16.msra.mxu0 0
        %621 = vmatprep.subr.bf16.mxu0 0
        %622 = vmatpush1.bf16.msra.mxu0 0
        %623 = vmatprep.subr.bf16.mxu0 0
        %624 = vmatpush1.bf16.msra.mxu0 0
        %625 = vmatprep.subr.bf16.mxu0 0
        %626 = vmatpush1.bf16.msra.mxu0 0
        %627 = vmatprep.subr.bf16.mxu0 0
        %628 = vmatpush1.bf16.msra.mxu0 0
        %629 = vmatprep.subr.bf16.mxu0 0
        %630 = vmatpush1.bf16.msra.mxu0 0
        %631 = vmatprep.subr.bf16.mxu0 0
        %632 = vmatpush1.bf16.msra.mxu0 0
        %633 = vmatprep.subr.bf16.mxu0 0
        %634 = vmatpush1.bf16.msra.mxu0 0
        %635 = vmatprep.subr.bf16.mxu0 0
        %636 = vmatpush1.bf16.msra.mxu0 0
        %637 = vmatprep.subr.bf16.mxu0 0
        %638 = vmatpush1.bf16.msra.mxu0 0
        %639 = vmatprep.subr.bf16.mxu0 0
        %640 = vmatpush1.bf16.msra.mxu0 0
        %641 = vmatprep.subr.bf16.mxu0 0
        %642 = vmatpush1.bf16.msra.mxu0 0
        %643 = vmatprep.mubr.bf16.mxu0 0
        %644 = vmatmul.mubr.bf16.gmra.mrb[0].mxu0 %v609
        %v645 = vpop.f32.mrb[0].mxu0
        %v646 = vadd.f32 %v597, %v645
        %v647 = vpop.f32.mrb[0].mxu0
        %v648 = vpop.f32.mrb[0].mxu0
        %v649 = vadd.f32 %v600, %v648
        %v650 = vpop.f32.mrb[0].mxu0
        %651 = vdwg.mxu0
        %s652 = scalar_lea.vmem [#allocation6], 32
        %v653 = vld [vmem:[%s652] sm:$0xf]
        %v654 = vld [vmem:[%s652 + $0x4] sm:$0xf]
        %v655 = vld [vmem:[%s652 + $0x8] sm:$0xf]
        %v656 = vld [vmem:[%s652 + $0xc] sm:$0xf]
        %v661 = vunpack.c.l.b16 %v653
        %v662 = vunpack.c.l.b16 %v654
        %v663 = vunpack.c.l.b16 %v655
        %v664 = vunpack.c.l.b16 %v656
        %v665 = vpack.c.b16 %v662, %v661
        %v666 = vpack.c.b16 %v664, %v663
        %667 = vrot.lane.b32.xlu0 %v409, 126
        %v668 = vpop.permute.xlu0 %667
        %669 = vrot.lane.b32.xlu0 %v410, 126
        %v670 = vpop.permute.xlu0 %669
        %671 = vrot.lane.b32.xlu0 %v411, 126
        %v672 = vpop.permute.xlu0 %671
        %673 = vrot.lane.b32.xlu0 %v412, 126
        %v674 = vpop.permute.xlu0 %673
        %v680 = vsel %vm425, %v665, 0
        %v683 = vsel %vm425, %v666, 0
        %685 = vmatprep.subr.bf16.mxu0 0
        %686 = vmatpush1.bf16.msra.mxu0 %v668
        %687 = vmatprep.subr.bf16.mxu0 0
        %688 = vmatpush1.bf16.msra.mxu0 %v670
        %689 = vmatprep.subr.bf16.mxu0 0
        %690 = vmatpush1.bf16.msra.mxu0 %v672
        %691 = vmatprep.subr.bf16.mxu0 0
        %692 = vmatpush1.bf16.msra.mxu0 %v674
        %693 = vmatprep.subr.bf16.mxu0 0
        %694 = vmatpush1.bf16.msra.mxu0 0
        %695 = vmatprep.subr.bf16.mxu0 0
        %696 = vmatpush1.bf16.msra.mxu0 0
        %697 = vmatprep.subr.bf16.mxu0 0
        %698 = vmatpush1.bf16.msra.mxu0 0
        %699 = vmatprep.subr.bf16.mxu0 0
        %700 = vmatpush1.bf16.msra.mxu0 0
        %701 = vmatprep.subr.bf16.mxu0 0
        %702 = vmatpush1.bf16.msra.mxu0 0
        %703 = vmatprep.subr.bf16.mxu0 0
        %704 = vmatpush1.bf16.msra.mxu0 0
        %705 = vmatprep.subr.bf16.mxu0 0
        %706 = vmatpush1.bf16.msra.mxu0 0
        %707 = vmatprep.subr.bf16.mxu0 0
        %708 = vmatpush1.bf16.msra.mxu0 0
        %709 = vmatprep.subr.bf16.mxu0 0
        %710 = vmatpush1.bf16.msra.mxu0 0
        %711 = vmatprep.subr.bf16.mxu0 0
        %712 = vmatpush1.bf16.msra.mxu0 0
        %713 = vmatprep.subr.bf16.mxu0 0
        %714 = vmatpush1.bf16.msra.mxu0 0
        %715 = vmatprep.subr.bf16.mxu0 0
        %716 = vmatpush1.bf16.msra.mxu0 0
        %717 = vmatprep.mubr.bf16.mxu0 0
        %718 = vmatmul.mubr.bf16.gmra.mrb[0].mxu0 %v680
        %v719 = vpop.f32.mrb[0].mxu0
        %v720 = vadd.f32 0.0, %v719
        %v721 = vpop.f32.mrb[0].mxu0
        %v722 = vpop.f32.mrb[0].mxu0
        %v723 = vadd.f32 0.0, %v722
        %v724 = vpop.f32.mrb[0].mxu0
        %725 = vmatprep.mubr.bf16.mxu0 0
        %726 = vmatmul.mubr.bf16.gmra.mrb[0].mxu0 %v683
        %v727 = vpop.f32.mrb[0].mxu0
        %v728 = vadd.f32 0.0, %v727
        %v729 = vpop.f32.mrb[0].mxu0
        %v730 = vpop.f32.mrb[0].mxu0
        %v731 = vadd.f32 0.0, %v730
        %v732 = vpop.f32.mrb[0].mxu0
        %733 = vdwg.mxu0
        %v734 = vadd.f32 %v536, %v720
        %v735 = vadd.f32 %v539, %v723
        %v736 = vadd.f32 %v544, %v728
        %v737 = vadd.f32 %v547, %v731
        %s738 = scalar_lea.vmem [#allocation8], 16
        %v739 = vld [vmem:[%s738] sm:$0xf]
        %v740 = vld [vmem:[%s738 + $0x4] sm:$0xf]
        %v743 = vunpack.c.l.b16 %v739
        %v744 = vunpack.c.l.b16 %v740
        %v745 = vpack.c.b16 %v744, %v743
        %v747 = vsel %vm558, %v745, 0
        %749 = vmatprep.subr.bf16.mxu0 0
        %750 = vmatpush1.bf16.msra.mxu0 %v668
        %751 = vmatprep.subr.bf16.mxu0 0
        %752 = vmatpush1.bf16.msra.mxu0 %v670
        %753 = vmatprep.subr.bf16.mxu0 0
        %754 = vmatpush1.bf16.msra.mxu0 %v672
        %755 = vmatprep.subr.bf16.mxu0 0
        %756 = vmatpush1.bf16.msra.mxu0 0
        %757 = vmatprep.subr.bf16.mxu0 0
        %758 = vmatpush1.bf16.msra.mxu0 0
        %759 = vmatprep.subr.bf16.mxu0 0
        %760 = vmatpush1.bf16.msra.mxu0 0
        %761 = vmatprep.subr.bf16.mxu0 0
        %762 = vmatpush1.bf16.msra.mxu0 0
        %763 = vmatprep.subr.bf16.mxu0 0
        %764 = vmatpush1.bf16.msra.mxu0 0
        %765 = vmatprep.subr.bf16.mxu0 0
        %766 = vmatpush1.bf16.msra.mxu0 0
        %767 = vmatprep.subr.bf16.mxu0 0
        %768 = vmatpush1.bf16.msra.mxu0 0
        %769 = vmatprep.subr.bf16.mxu0 0
        %770 = vmatpush1.bf16.msra.mxu0 0
        %771 = vmatprep.subr.bf16.mxu0 0
        %772 = vmatpush1.bf16.msra.mxu0 0
        %773 = vmatprep.subr.bf16.mxu0 0
        %774 = vmatpush1.bf16.msra.mxu0 0
        %775 = vmatprep.subr.bf16.mxu0 0
        %776 = vmatpush1.bf16.msra.mxu0 0
        %777 = vmatprep.subr.bf16.mxu0 0
        %778 = vmatpush1.bf16.msra.mxu0 0
        %779 = vmatprep.subr.bf16.mxu0 0
        %780 = vmatpush1.bf16.msra.mxu0 0
        %781 = vmatprep.mubr.bf16.mxu0 0
        %782 = vmatmul.mubr.bf16.gmra.mrb[0].mxu0 %v747
        %v783 = vpop.f32.mrb[0].mxu0
        %v784 = vadd.f32 0.0, %v783
        %v785 = vpop.f32.mrb[0].mxu0
        %v786 = vpop.f32.mrb[0].mxu0
        %v787 = vadd.f32 0.0, %v786
        %v788 = vpop.f32.mrb[0].mxu0
        %789 = vdwg.mxu0
        %v790 = vadd.f32 %v646, %v784
        %v791 = vadd.f32 %v649, %v787
        %s792 = scalar_lea.vmem [#allocation6], 48
        %v793 = vld [vmem:[%s792] sm:$0xf]
        %v794 = vld [vmem:[%s792 + $0x4] sm:$0xf]
        %v795 = vld [vmem:[%s792 + $0x8] sm:$0xf]
        %v796 = vld [vmem:[%s792 + $0xc] sm:$0xf]
        %v801 = vunpack.c.l.b16 %v793
        %v802 = vunpack.c.l.b16 %v794
        %v803 = vunpack.c.l.b16 %v795
        %v804 = vunpack.c.l.b16 %v796
        %v805 = vpack.c.b16 %v802, %v801
        %v806 = vpack.c.b16 %v804, %v803
        %807 = vrot.lane.b32.xlu0 %v409, 118
        %v808 = vpop.permute.xlu0 %807
        %809 = vrot.lane.b32.xlu0 %v410, 118
        %v810 = vpop.permute.xlu0 %809
        %811 = vrot.lane.b32.xlu0 %v411, 118
        %v812 = vpop.permute.xlu0 %811
        %813 = vrot.lane.b32.xlu0 %v412, 118
        %v814 = vpop.permute.xlu0 %813
        %v820 = vsel %vm425, %v805, 0
        %v823 = vsel %vm425, %v806, 0
        %825 = vmatprep.subr.bf16.mxu0 0
        %826 = vmatpush1.bf16.msra.mxu0 %v808
        %827 = vmatprep.subr.bf16.mxu0 0
        %828 = vmatpush1.bf16.msra.mxu0 %v810
        %829 = vmatprep.subr.bf16.mxu0 0
        %830 = vmatpush1.bf16.msra.mxu0 %v812
        %831 = vmatprep.subr.bf16.mxu0 0
        %832 = vmatpush1.bf16.msra.mxu0 %v814
        %833 = vmatprep.subr.bf16.mxu0 0
        %834 = vmatpush1.bf16.msra.mxu0 0
        %835 = vmatprep.subr.bf16.mxu0 0
        %836 = vmatpush1.bf16.msra.mxu0 0
        %837 = vmatprep.subr.bf16.mxu0 0
        %838 = vmatpush1.bf16.msra.mxu0 0
        %839 = vmatprep.subr.bf16.mxu0 0
        %840 = vmatpush1.bf16.msra.mxu0 0
        %841 = vmatprep.subr.bf16.mxu0 0
        %842 = vmatpush1.bf16.msra.mxu0 0
        %843 = vmatprep.subr.bf16.mxu0 0
        %844 = vmatpush1.bf16.msra.mxu0 0
        %845 = vmatprep.subr.bf16.mxu0 0
        %846 = vmatpush1.bf16.msra.mxu0 0
        %847 = vmatprep.subr.bf16.mxu0 0
        %848 = vmatpush1.bf16.msra.mxu0 0
        %849 = vmatprep.subr.bf16.mxu0 0
        %850 = vmatpush1.bf16.msra.mxu0 0
        %851 = vmatprep.subr.bf16.mxu0 0
        %852 = vmatpush1.bf16.msra.mxu0 0
        %853 = vmatprep.subr.bf16.mxu0 0
        %854 = vmatpush1.bf16.msra.mxu0 0
        %855 = vmatprep.subr.bf16.mxu0 0
        %856 = vmatpush1.bf16.msra.mxu0 0
        %857 = vmatprep.mubr.bf16.mxu0 0
        %858 = vmatmul.mubr.bf16.gmra.mrb[0].mxu0 %v820
        %v859 = vpop.f32.mrb[0].mxu0
        %v860 = vadd.f32 0.0, %v859
        %v861 = vpop.f32.mrb[0].mxu0
        %v862 = vpop.f32.mrb[0].mxu0
        %v863 = vadd.f32 0.0, %v862
        %v864 = vpop.f32.mrb[0].mxu0
        %865 = vmatprep.mubr.bf16.mxu0 0
        %866 = vmatmul.mubr.bf16.gmra.mrb[0].mxu0 %v823
        %v867 = vpop.f32.mrb[0].mxu0
        %v868 = vadd.f32 0.0, %v867
        %v869 = vpop.f32.mrb[0].mxu0
        %v870 = vpop.f32.mrb[0].mxu0
        %v871 = vadd.f32 0.0, %v870
        %v872 = vpop.f32.mrb[0].mxu0
        %873 = vdwg.mxu0
        %v874 = vadd.f32 %v734, %v860
        %v875 = vadd.f32 %v735, %v863
        %v876 = vadd.f32 %v736, %v868
        %v877 = vadd.f32 %v737, %v871
        %s878 = scalar_lea.vmem [#allocation8], 24
        %v879 = vld [vmem:[%s878] sm:$0xf]
        %v880 = vld [vmem:[%s878 + $0x4] sm:$0xf]
        %v883 = vunpack.c.l.b16 %v879
        %v884 = vunpack.c.l.b16 %v880
        %v885 = vpack.c.b16 %v884, %v883
        %v887 = vsel %vm558, %v885, 0
        %889 = vmatprep.subr.bf16.mxu0 0
        %890 = vmatpush1.bf16.msra.mxu0 %v808
        %891 = vmatprep.subr.bf16.mxu0 0
        %892 = vmatpush1.bf16.msra.mxu0 %v810
        %893 = vmatprep.subr.bf16.mxu0 0
        %894 = vmatpush1.bf16.msra.mxu0 %v812
        %895 = vmatprep.subr.bf16.mxu0 0
        %896 = vmatpush1.bf16.msra.mxu0 0
        %897 = vmatprep.subr.bf16.mxu0 0
        %898 = vmatpush1.bf16.msra.mxu0 0
        %899 = vmatprep.subr.bf16.mxu0 0
        %900 = vmatpush1.bf16.msra.mxu0 0
        %901 = vmatprep.subr.bf16.mxu0 0
        %902 = vmatpush1.bf16.msra.mxu0 0
        %903 = vmatprep.subr.bf16.mxu0 0
        %904 = vmatpush1.bf16.msra.mxu0 0
        %905 = vmatprep.subr.bf16.mxu0 0
        %906 = vmatpush1.bf16.msra.mxu0 0
        %907 = vmatprep.subr.bf16.mxu0 0
        %908 = vmatpush1.bf16.msra.mxu0 0
        %909 = vmatprep.subr.bf16.mxu0 0
        %910 = vmatpush1.bf16.msra.mxu0 0
        %911 = vmatprep.subr.bf16.mxu0 0
        %912 = vmatpush1.bf16.msra.mxu0 0
        %913 = vmatprep.subr.bf16.mxu0 0
        %914 = vmatpush1.bf16.msra.mxu0 0
        %915 = vmatprep.subr.bf16.mxu0 0
        %916 = vmatpush1.bf16.msra.mxu0 0
        %917 = vmatprep.subr.bf16.mxu0 0
        %918 = vmatpush1.bf16.msra.mxu0 0
        %919 = vmatprep.subr.bf16.mxu0 0
        %920 = vmatpush1.bf16.msra.mxu0 0
        %921 = vmatprep.mubr.bf16.mxu0 0
        %922 = vmatmul.mubr.bf16.gmra.mrb[0].mxu0 %v887
        %v923 = vpop.f32.mrb[0].mxu0
        %v924 = vadd.f32 0.0, %v923
        %v925 = vpop.f32.mrb[0].mxu0
        %v926 = vpop.f32.mrb[0].mxu0
        %v927 = vadd.f32 0.0, %v926
        %v928 = vpop.f32.mrb[0].mxu0
        %929 = vdwg.mxu0
        %v930 = vadd.f32 %v790, %v924
        %v931 = vadd.f32 %v791, %v927
        %s932 = scalar_lea.vmem [#allocation6], 64
        %v933 = vld [vmem:[%s932] sm:$0xf]
        %v934 = vld [vmem:[%s932 + $0x4] sm:$0xf]
        %v935 = vld [vmem:[%s932 + $0x8] sm:$0xf]
        %v936 = vld [vmem:[%s932 + $0xc] sm:$0xf]
        %v941 = vunpack.c.l.b16 %v933
        %v942 = vunpack.c.l.b16 %v934
        %v943 = vunpack.c.l.b16 %v935
        %v944 = vunpack.c.l.b16 %v936
        %v945 = vpack.c.b16 %v942, %v941
        %v946 = vpack.c.b16 %v944, %v943
        %947 = vrot.lane.b32.xlu0 %v409, 117
        %v948 = vpop.permute.xlu0 %947
        %949 = vrot.lane.b32.xlu0 %v410, 117
        %v950 = vpop.permute.xlu0 %949
        %951 = vrot.lane.b32.xlu0 %v411, 117
        %v952 = vpop.permute.xlu0 %951
        %953 = vrot.lane.b32.xlu0 %v412, 117
        %v954 = vpop.permute.xlu0 %953
        %v960 = vsel %vm425, %v945, 0
        %v963 = vsel %vm425, %v946, 0
        %965 = vmatprep.subr.bf16.mxu0 0
        %966 = vmatpush1.bf16.msra.mxu0 %v948
        %967 = vmatprep.subr.bf16.mxu0 0
        %968 = vmatpush1.bf16.msra.mxu0 %v950
        %969 = vmatprep.subr.bf16.mxu0 0
        %970 = vmatpush1.bf16.msra.mxu0 %v952
        %971 = vmatprep.subr.bf16.mxu0 0
        %972 = vmatpush1.bf16.msra.mxu0 %v954
        %973 = vmatprep.subr.bf16.mxu0 0
        %974 = vmatpush1.bf16.msra.mxu0 0
        %975 = vmatprep.subr.bf16.mxu0 0
        %976 = vmatpush1.bf16.msra.mxu0 0
        %977 = vmatprep.subr.bf16.mxu0 0
        %978 = vmatpush1.bf16.msra.mxu0 0
        %979 = vmatprep.subr.bf16.mxu0 0
        %980 = vmatpush1.bf16.msra.mxu0 0
        %981 = vmatprep.subr.bf16.mxu0 0
        %982 = vmatpush1.bf16.msra.mxu0 0
        %983 = vmatprep.subr.bf16.mxu0 0
        %984 = vmatpush1.bf16.msra.mxu0 0
        %985 = vmatprep.subr.bf16.mxu0 0
        %986 = vmatpush1.bf16.msra.mxu0 0
        %987 = vmatprep.subr.bf16.mxu0 0
        %988 = vmatpush1.bf16.msra.mxu0 0
        %989 = vmatprep.subr.bf16.mxu0 0
        %990 = vmatpush1.bf16.msra.mxu0 0
        %991 = vmatprep.subr.bf16.mxu0 0
        %992 = vmatpush1.bf16.msra.mxu0 0
        %993 = vmatprep.subr.bf16.mxu0 0
        %994 = vmatpush1.bf16.msra.mxu0 0
        %995 = vmatprep.subr.bf16.mxu0 0
        %996 = vmatpush1.bf16.msra.mxu0 0
        %997 = vmatprep.mubr.bf16.mxu0 0
        %998 = vmatmul.mubr.bf16.gmra.mrb[0].mxu0 %v960
        %v999 = vpop.f32.mrb[0].mxu0
        %v1000 = vadd.f32 0.0, %v999
        %v1001 = vpop.f32.mrb[0].mxu0
        %v1002 = vpop.f32.mrb[0].mxu0
        %v1003 = vadd.f32 0.0, %v1002
        %v1004 = vpop.f32.mrb[0].mxu0
        %1005 = vmatprep.mubr.bf16.mxu0 0
        %1006 = vmatmul.mubr.bf16.gmra.mrb[0].mxu0 %v963
        %v1007 = vpop.f32.mrb[0].mxu0
        %v1008 = vadd.f32 0.0, %v1007
        %v1009 = vpop.f32.mrb[0].mxu0
        %v1010 = vpop.f32.mrb[0].mxu0
        %v1011 = vadd.f32 0.0, %v1010
        %v1012 = vpop.f32.mrb[0].mxu0
        %1013 = vdwg.mxu0
        %v1014 = vadd.f32 %v874, %v1000
        %v1015 = vadd.f32 %v875, %v1003
        %v1016 = vadd.f32 %v876, %v1008
        %v1017 = vadd.f32 %v877, %v1011
        %s1018 = scalar_lea.vmem [#allocation8], 32
        %v1019 = vld [vmem:[%s1018] sm:$0xf]
        %v1020 = vld [vmem:[%s1018 + $0x4] sm:$0xf]
        %v1023 = vunpack.c.l.b16 %v1019
        %v1024 = vunpack.c.l.b16 %v1020
        %v1025 = vpack.c.b16 %v1024, %v1023
        %v1027 = vsel %vm558, %v1025, 0
        %1029 = vmatprep.subr.bf16.mxu0 0
        %1030 = vmatpush1.bf16.msra.mxu0 %v948
        %1031 = vmatprep.subr.bf16.mxu0 0
        %1032 = vmatpush1.bf16.msra.mxu0 %v950
        %1033 = vmatprep.subr.bf16.mxu0 0
        %1034 = vmatpush1.bf16.msra.mxu0 %v952
        %1035 = vmatprep.subr.bf16.mxu0 0
        %1036 = vmatpush1.bf16.msra.mxu0 0
        %1037 = vmatprep.subr.bf16.mxu0 0
        %1038 = vmatpush1.bf16.msra.mxu0 0
        %1039 = vmatprep.subr.bf16.mxu0 0
        %1040 = vmatpush1.bf16.msra.mxu0 0
        %1041 = vmatprep.subr.bf16.mxu0 0
        %1042 = vmatpush1.bf16.msra.mxu0 0
        %1043 = vmatprep.subr.bf16.mxu0 0
        %1044 = vmatpush1.bf16.msra.mxu0 0
        %1045 = vmatprep.subr.bf16.mxu0 0
        %1046 = vmatpush1.bf16.msra.mxu0 0
        %1047 = vmatprep.subr.bf16.mxu0 0
        %1048 = vmatpush1.bf16.msra.mxu0 0
        %1049 = vmatprep.subr.bf16.mxu0 0
        %1050 = vmatpush1.bf16.msra.mxu0 0
        %1051 = vmatprep.subr.bf16.mxu0 0
        %1052 = vmatpush1.bf16.msra.mxu0 0
        %1053 = vmatprep.subr.bf16.mxu0 0
        %1054 = vmatpush1.bf16.msra.mxu0 0
        %1055 = vmatprep.subr.bf16.mxu0 0
        %1056 = vmatpush1.bf16.msra.mxu0 0
        %1057 = vmatprep.subr.bf16.mxu0 0
        %1058 = vmatpush1.bf16.msra.mxu0 0
        %1059 = vmatprep.subr.bf16.mxu0 0
        %1060 = vmatpush1.bf16.msra.mxu0 0
        %1061 = vmatprep.mubr.bf16.mxu0 0
        %1062 = vmatmul.mubr.bf16.gmra.mrb[0].mxu0 %v1027
        %v1063 = vpop.f32.mrb[0].mxu0
        %v1064 = vadd.f32 0.0, %v1063
        %v1065 = vpop.f32.mrb[0].mxu0
        %v1066 = vpop.f32.mrb[0].mxu0
        %v1067 = vadd.f32 0.0, %v1066
        %v1068 = vpop.f32.mrb[0].mxu0
        %1069 = vdwg.mxu0
        %v1070 = vadd.f32 %v930, %v1064
        %v1071 = vadd.f32 %v931, %v1067
        %s1072 = scalar_lea.vmem [#allocation6], 80
        %v1073 = vld [vmem:[%s1072] sm:$0xf]
        %v1074 = vld [vmem:[%s1072 + $0x4] sm:$0xf]
        %v1075 = vld [vmem:[%s1072 + $0x8] sm:$0xf]
        %v1076 = vld [vmem:[%s1072 + $0xc] sm:$0xf]
        %v1081 = vunpack.c.l.b16 %v1073
        %v1082 = vunpack.c.l.b16 %v1074
        %v1083 = vunpack.c.l.b16 %v1075
        %v1084 = vunpack.c.l.b16 %v1076
        %v1085 = vpack.c.b16 %v1082, %v1081
        %v1086 = vpack.c.b16 %v1084, %v1083
        %1087 = vrot.lane.b32.xlu0 %v409, 116
        %v1088 = vpop.permute.xlu0 %1087
        %1089 = vrot.lane.b32.xlu0 %v410, 116
        %v1090 = vpop.permute.xlu0 %1089
        %1091 = vrot.lane.b32.xlu0 %v411, 116
        %v1092 = vpop.permute.xlu0 %1091
        %1093 = vrot.lane.b32.xlu0 %v412, 116
        %v1094 = vpop.permute.xlu0 %1093
        %v1100 = vsel %vm425, %v1085, 0
        %v1103 = vsel %vm425, %v1086, 0
        %1105 = vmatprep.subr.bf16.mxu0 0
        %1106 = vmatpush1.bf16.msra.mxu0 %v1088
        %1107 = vmatprep.subr.bf16.mxu0 0
        %1108 = vmatpush1.bf16.msra.mxu0 %v1090
        %1109 = vmatprep.subr.bf16.mxu0 0
        %1110 = vmatpush1.bf16.msra.mxu0 %v1092
        %1111 = vmatprep.subr.bf16.mxu0 0
        %1112 = vmatpush1.bf16.msra.mxu0 %v1094
        %1113 = vmatprep.subr.bf16.mxu0 0
        %1114 = vmatpush1.bf16.msra.mxu0 0
        %1115 = vmatprep.subr.bf16.mxu0 0
        %1116 = vmatpush1.bf16.msra.mxu0 0
        %1117 = vmatprep.subr.bf16.mxu0 0
        %1118 = vmatpush1.bf16.msra.mxu0 0
        %1119 = vmatprep.subr.bf16.mxu0 0
        %1120 = vmatpush1.bf16.msra.mxu0 0
        %1121 = vmatprep.subr.bf16.mxu0 0
        %1122 = vmatpush1.bf16.msra.mxu0 0
        %1123 = vmatprep.subr.bf16.mxu0 0
        %1124 = vmatpush1.bf16.msra.mxu0 0
        %1125 = vmatprep.subr.bf16.mxu0 0
        %1126 = vmatpush1.bf16.msra.mxu0 0
        %1127 = vmatprep.subr.bf16.mxu0 0
        %1128 = vmatpush1.bf16.msra.mxu0 0
        %1129 = vmatprep.subr.bf16.mxu0 0
        %1130 = vmatpush1.bf16.msra.mxu0 0
        %1131 = vmatprep.subr.bf16.mxu0 0
        %1132 = vmatpush1.bf16.msra.mxu0 0
        %1133 = vmatprep.subr.bf16.mxu0 0
        %1134 = vmatpush1.bf16.msra.mxu0 0
        %1135 = vmatprep.subr.bf16.mxu0 0
        %1136 = vmatpush1.bf16.msra.mxu0 0
        %1137 = vmatprep.mubr.bf16.mxu0 0
        %1138 = vmatmul.mubr.bf16.gmra.mrb[0].mxu0 %v1100
        %v1139 = vpop.f32.mrb[0].mxu0
        %v1140 = vadd.f32 0.0, %v1139
        %v1141 = vpop.f32.mrb[0].mxu0
        %v1142 = vpop.f32.mrb[0].mxu0
        %v1143 = vadd.f32 0.0, %v1142
        %v1144 = vpop.f32.mrb[0].mxu0
        %1145 = vmatprep.mubr.bf16.mxu0 0
        %1146 = vmatmul.mubr.bf16.gmra.mrb[0].mxu0 %v1103
        %v1147 = vpop.f32.mrb[0].mxu0
        %v1148 = vadd.f32 0.0, %v1147
        %v1149 = vpop.f32.mrb[0].mxu0
        %v1150 = vpop.f32.mrb[0].mxu0
        %v1151 = vadd.f32 0.0, %v1150
        %v1152 = vpop.f32.mrb[0].mxu0
        %1153 = vdwg.mxu0
        %v1154 = vadd.f32 %v1014, %v1140
        %v1155 = vadd.f32 %v1015, %v1143
        %v1156 = vadd.f32 %v1016, %v1148
        %v1157 = vadd.f32 %v1017, %v1151
        %s1158 = scalar_lea.vmem [#allocation8], 40
        %v1159 = vld [vmem:[%s1158] sm:$0xf]
        %v1160 = vld [vmem:[%s1158 + $0x4] sm:$0xf]
        %v1163 = vunpack.c.l.b16 %v1159
        %v1164 = vunpack.c.l.b16 %v1160
        %v1165 = vpack.c.b16 %v1164, %v1163
        %v1167 = vsel %vm558, %v1165, 0
        %1169 = vmatprep.subr.bf16.mxu0 0
        %1170 = vmatpush1.bf16.msra.mxu0 %v1088
        %1171 = vmatprep.subr.bf16.mxu0 0
        %1172 = vmatpush1.bf16.msra.mxu0 %v1090
        %1173 = vmatprep.subr.bf16.mxu0 0
        %1174 = vmatpush1.bf16.msra.mxu0 %v1092
        %1175 = vmatprep.subr.bf16.mxu0 0
        %1176 = vmatpush1.bf16.msra.mxu0 0
        %1177 = vmatprep.subr.bf16.mxu0 0
        %1178 = vmatpush1.bf16.msra.mxu0 0
        %1179 = vmatprep.subr.bf16.mxu0 0
        %1180 = vmatpush1.bf16.msra.mxu0 0
        %1181 = vmatprep.subr.bf16.mxu0 0
        %1182 = vmatpush1.bf16.msra.mxu0 0
        %1183 = vmatprep.subr.bf16.mxu0 0
        %1184 = vmatpush1.bf16.msra.mxu0 0
        %1185 = vmatprep.subr.bf16.mxu0 0
        %1186 = vmatpush1.bf16.msra.mxu0 0
        %1187 = vmatprep.subr.bf16.mxu0 0
        %1188 = vmatpush1.bf16.msra.mxu0 0
        %1189 = vmatprep.subr.bf16.mxu0 0
        %1190 = vmatpush1.bf16.msra.mxu0 0
        %1191 = vmatprep.subr.bf16.mxu0 0
        %1192 = vmatpush1.bf16.msra.mxu0 0
        %1193 = vmatprep.subr.bf16.mxu0 0
        %1194 = vmatpush1.bf16.msra.mxu0 0
        %1195 = vmatprep.subr.bf16.mxu0 0
        %1196 = vmatpush1.bf16.msra.mxu0 0
        %1197 = vmatprep.subr.bf16.mxu0 0
        %1198 = vmatpush1.bf16.msra.mxu0 0
        %1199 = vmatprep.subr.bf16.mxu0 0
        %1200 = vmatpush1.bf16.msra.mxu0 0
        %1201 = vmatprep.mubr.bf16.mxu0 0
        %1202 = vmatmul.mubr.bf16.gmra.mrb[0].mxu0 %v1167
        %v1203 = vpop.f32.mrb[0].mxu0
        %v1204 = vadd.f32 0.0, %v1203
        %v1205 = vpop.f32.mrb[0].mxu0
        %v1206 = vpop.f32.mrb[0].mxu0
        %v1207 = vadd.f32 0.0, %v1206
        %v1208 = vpop.f32.mrb[0].mxu0
        %1209 = vdwg.mxu0
        %v1210 = vadd.f32 %v1070, %v1204
        %v1211 = vadd.f32 %v1071, %v1207
        %s1212 = scalar_lea.vmem [#allocation6], 96
        %v1213 = vld [vmem:[%s1212] sm:$0xf]
        %v1214 = vld [vmem:[%s1212 + $0x4] sm:$0xf]
        %v1215 = vld [vmem:[%s1212 + $0x8] sm:$0xf]
        %v1216 = vld [vmem:[%s1212 + $0xc] sm:$0xf]
        %v1221 = vunpack.c.l.b16 %v1213
        %v1222 = vunpack.c.l.b16 %v1214
        %v1223 = vunpack.c.l.b16 %v1215
        %v1224 = vunpack.c.l.b16 %v1216
        %v1225 = vpack.c.b16 %v1222, %v1221
        %v1226 = vpack.c.b16 %v1224, %v1223
        %1227 = vrot.lane.b32.xlu0 %v409, 108
        %v1228 = vpop.permute.xlu0 %1227
        %1229 = vrot.lane.b32.xlu0 %v410, 108
        %v1230 = vpop.permute.xlu0 %1229
        %1231 = vrot.lane.b32.xlu0 %v411, 108
        %v1232 = vpop.permute.xlu0 %1231
        %1233 = vrot.lane.b32.xlu0 %v412, 108
        %v1234 = vpop.permute.xlu0 %1233
        %v1240 = vsel %vm425, %v1225, 0
        %v1243 = vsel %vm425, %v1226, 0
        %1245 = vmatprep.subr.bf16.mxu0 0
        %1246 = vmatpush1.bf16.msra.mxu0 %v1228
        %1247 = vmatprep.subr.bf16.mxu0 0
        %1248 = vmatpush1.bf16.msra.mxu0 %v1230
        %1249 = vmatprep.subr.bf16.mxu0 0
        %1250 = vmatpush1.bf16.msra.mxu0 %v1232
        %1251 = vmatprep.subr.bf16.mxu0 0
        %1252 = vmatpush1.bf16.msra.mxu0 %v1234
        %1253 = vmatprep.subr.bf16.mxu0 0
        %1254 = vmatpush1.bf16.msra.mxu0 0
        %1255 = vmatprep.subr.bf16.mxu0 0
        %1256 = vmatpush1.bf16.msra.mxu0 0
        %1257 = vmatprep.subr.bf16.mxu0 0
        %1258 = vmatpush1.bf16.msra.mxu0 0
        %1259 = vmatprep.subr.bf16.mxu0 0
        %1260 = vmatpush1.bf16.msra.mxu0 0
        %1261 = vmatprep.subr.bf16.mxu0 0
        %1262 = vmatpush1.bf16.msra.mxu0 0
        %1263 = vmatprep.subr.bf16.mxu0 0
        %1264 = vmatpush1.bf16.msra.mxu0 0
        %1265 = vmatprep.subr.bf16.mxu0 0
        %1266 = vmatpush1.bf16.msra.mxu0 0
        %1267 = vmatprep.subr.bf16.mxu0 0
        %1268 = vmatpush1.bf16.msra.mxu0 0
        %1269 = vmatprep.subr.bf16.mxu0 0
        %1270 = vmatpush1.bf16.msra.mxu0 0
        %1271 = vmatprep.subr.bf16.mxu0 0
        %1272 = vmatpush1.bf16.msra.mxu0 0
        %1273 = vmatprep.subr.bf16.mxu0 0
        %1274 = vmatpush1.bf16.msra.mxu0 0
        %1275 = vmatprep.subr.bf16.mxu0 0
        %1276 = vmatpush1.bf16.msra.mxu0 0
        %1277 = vmatprep.mubr.bf16.mxu0 0
        %1278 = vmatmul.mubr.bf16.gmra.mrb[0].mxu0 %v1240
        %v1279 = vpop.f32.mrb[0].mxu0
        %v1280 = vadd.f32 0.0, %v1279
        %v1281 = vpop.f32.mrb[0].mxu0
        %v1282 = vpop.f32.mrb[0].mxu0
        %v1283 = vadd.f32 0.0, %v1282
        %v1284 = vpop.f32.mrb[0].mxu0
        %1285 = vmatprep.mubr.bf16.mxu0 0
        %1286 = vmatmul.mubr.bf16.gmra.mrb[0].mxu0 %v1243
        %v1287 = vpop.f32.mrb[0].mxu0
        %v1288 = vadd.f32 0.0, %v1287
        %v1289 = vpop.f32.mrb[0].mxu0
        %v1290 = vpop.f32.mrb[0].mxu0
        %v1291 = vadd.f32 0.0, %v1290
        %v1292 = vpop.f32.mrb[0].mxu0
        %1293 = vdwg.mxu0
        %v1294 = vadd.f32 %v1154, %v1280
        %v1295 = vadd.f32 %v1155, %v1283
        %v1296 = vadd.f32 %v1156, %v1288
        %v1297 = vadd.f32 %v1157, %v1291
        %s1298 = scalar_lea.vmem [#allocation8], 48
        %v1299 = vld [vmem:[%s1298] sm:$0xf]
        %v1300 = vld [vmem:[%s1298 + $0x4] sm:$0xf]
        %v1303 = vunpack.c.l.b16 %v1299
        %v1304 = vunpack.c.l.b16 %v1300
        %v1305 = vpack.c.b16 %v1304, %v1303
        %v1307 = vsel %vm558, %v1305, 0
        %1309 = vmatprep.subr.bf16.mxu0 0
        %1310 = vmatpush1.bf16.msra.mxu0 %v1228
        %1311 = vmatprep.subr.bf16.mxu0 0
        %1312 = vmatpush1.bf16.msra.mxu0 %v1230
        %1313 = vmatprep.subr.bf16.mxu0 0
        %1314 = vmatpush1.bf16.msra.mxu0 %v1232
        %1315 = vmatprep.subr.bf16.mxu0 0
        %1316 = vmatpush1.bf16.msra.mxu0 0
        %1317 = vmatprep.subr.bf16.mxu0 0
        %1318 = vmatpush1.bf16.msra.mxu0 0
        %1319 = vmatprep.subr.bf16.mxu0 0
        %1320 = vmatpush1.bf16.msra.mxu0 0
        %1321 = vmatprep.subr.bf16.mxu0 0
        %1322 = vmatpush1.bf16.msra.mxu0 0
        %1323 = vmatprep.subr.bf16.mxu0 0
        %1324 = vmatpush1.bf16.msra.mxu0 0
        %1325 = vmatprep.subr.bf16.mxu0 0
        %1326 = vmatpush1.bf16.msra.mxu0 0
        %1327 = vmatprep.subr.bf16.mxu0 0
        %1328 = vmatpush1.bf16.msra.mxu0 0
        %1329 = vmatprep.subr.bf16.mxu0 0
        %1330 = vmatpush1.bf16.msra.mxu0 0
        %1331 = vmatprep.subr.bf16.mxu0 0
        %1332 = vmatpush1.bf16.msra.mxu0 0
        %1333 = vmatprep.subr.bf16.mxu0 0
        %1334 = vmatpush1.bf16.msra.mxu0 0
        %1335 = vmatprep.subr.bf16.mxu0 0
        %1336 = vmatpush1.bf16.msra.mxu0 0
        %1337 = vmatprep.subr.bf16.mxu0 0
        %1338 = vmatpush1.bf16.msra.mxu0 0
        %1339 = vmatprep.subr.bf16.mxu0 0
        %1340 = vmatpush1.bf16.msra.mxu0 0
        %1341 = vmatprep.mubr.bf16.mxu0 0
        %1342 = vmatmul.mubr.bf16.gmra.mrb[0].mxu0 %v1307
        %v1343 = vpop.f32.mrb[0].mxu0
        %v1344 = vadd.f32 0.0, %v1343
        %v1345 = vpop.f32.mrb[0].mxu0
        %v1346 = vpop.f32.mrb[0].mxu0
        %v1347 = vadd.f32 0.0, %v1346
        %v1348 = vpop.f32.mrb[0].mxu0
        %1349 = vdwg.mxu0
        %v1350 = vadd.f32 %v1210, %v1344
        %v1351 = vadd.f32 %v1211, %v1347
        %s1352 = scalar_lea.vmem [#allocation6], 112
        %v1353 = vld [vmem:[%s1352] sm:$0xf]
        %v1354 = vld [vmem:[%s1352 + $0x4] sm:$0xf]
        %v1355 = vld [vmem:[%s1352 + $0x8] sm:$0xf]
        %v1356 = vld [vmem:[%s1352 + $0xc] sm:$0xf]
        %v1361 = vunpack.c.l.b16 %v1353
        %v1362 = vunpack.c.l.b16 %v1354
        %v1363 = vunpack.c.l.b16 %v1355
        %v1364 = vunpack.c.l.b16 %v1356
        %v1365 = vpack.c.b16 %v1362, %v1361
        %v1366 = vpack.c.b16 %v1364, %v1363
        %1367 = vrot.lane.b32.xlu0 %v409, 107
        %v1368 = vpop.permute.xlu0 %1367
        %1369 = vrot.lane.b32.xlu0 %v410, 107
        %v1370 = vpop.permute.xlu0 %1369
        %1371 = vrot.lane.b32.xlu0 %v411, 107
        %v1372 = vpop.permute.xlu0 %1371
        %1373 = vrot.lane.b32.xlu0 %v412, 107
        %v1374 = vpop.permute.xlu0 %1373
        %v1380 = vsel %vm425, %v1365, 0
        %v1383 = vsel %vm425, %v1366, 0
        %1385 = vmatprep.subr.bf16.mxu0 0
        %1386 = vmatpush1.bf16.msra.mxu0 %v1368
        %1387 = vmatprep.subr.bf16.mxu0 0
        %1388 = vmatpush1.bf16.msra.mxu0 %v1370
        %1389 = vmatprep.subr.bf16.mxu0 0
        %1390 = vmatpush1.bf16.msra.mxu0 %v1372
        %1391 = vmatprep.subr.bf16.mxu0 0
        %1392 = vmatpush1.bf16.msra.mxu0 %v1374
        %1393 = vmatprep.subr.bf16.mxu0 0
        %1394 = vmatpush1.bf16.msra.mxu0 0
        %1395 = vmatprep.subr.bf16.mxu0 0
        %1396 = vmatpush1.bf16.msra.mxu0 0
        %1397 = vmatprep.subr.bf16.mxu0 0
        %1398 = vmatpush1.bf16.msra.mxu0 0
        %1399 = vmatprep.subr.bf16.mxu0 0
        %1400 = vmatpush1.bf16.msra.mxu0 0
        %1401 = vmatprep.subr.bf16.mxu0 0
        %1402 = vmatpush1.bf16.msra.mxu0 0
        %1403 = vmatprep.subr.bf16.mxu0 0
        %1404 = vmatpush1.bf16.msra.mxu0 0
        %1405 = vmatprep.subr.bf16.mxu0 0
        %1406 = vmatpush1.bf16.msra.mxu0 0
        %1407 = vmatprep.subr.bf16.mxu0 0
        %1408 = vmatpush1.bf16.msra.mxu0 0
        %1409 = vmatprep.subr.bf16.mxu0 0
        %1410 = vmatpush1.bf16.msra.mxu0 0
        %1411 = vmatprep.subr.bf16.mxu0 0
        %1412 = vmatpush1.bf16.msra.mxu0 0
        %1413 = vmatprep.subr.bf16.mxu0 0
        %1414 = vmatpush1.bf16.msra.mxu0 0
        %1415 = vmatprep.subr.bf16.mxu0 0
        %1416 = vmatpush1.bf16.msra.mxu0 0
        %1417 = vmatprep.mubr.bf16.mxu0 0
        %1418 = vmatmul.mubr.bf16.gmra.mrb[0].mxu0 %v1380
        %v1419 = vpop.f32.mrb[0].mxu0
        %v1420 = vadd.f32 0.0, %v1419
        %v1421 = vpop.f32.mrb[0].mxu0
        %v1422 = vpop.f32.mrb[0].mxu0
        %v1423 = vadd.f32 0.0, %v1422
        %v1424 = vpop.f32.mrb[0].mxu0
        %1425 = vmatprep.mubr.bf16.mxu0 0
        %1426 = vmatmul.mubr.bf16.gmra.mrb[0].mxu0 %v1383
        %v1427 = vpop.f32.mrb[0].mxu0
        %v1428 = vadd.f32 0.0, %v1427
        %v1429 = vpop.f32.mrb[0].mxu0
        %v1430 = vpop.f32.mrb[0].mxu0
        %v1431 = vadd.f32 0.0, %v1430
        %v1432 = vpop.f32.mrb[0].mxu0
        %1433 = vdwg.mxu0
        %v1434 = vadd.f32 %v1294, %v1420
        %v1435 = vadd.f32 %v1295, %v1423
        %v1436 = vadd.f32 %v1296, %v1428
        %v1437 = vadd.f32 %v1297, %v1431
        %s1438 = scalar_lea.vmem [#allocation8], 56
        %v1439 = vld [vmem:[%s1438] sm:$0xf]
        %v1440 = vld [vmem:[%s1438 + $0x4] sm:$0xf]
        %v1443 = vunpack.c.l.b16 %v1439
        %v1444 = vunpack.c.l.b16 %v1440
        %v1445 = vpack.c.b16 %v1444, %v1443
        %v1447 = vsel %vm558, %v1445, 0
        %1449 = vmatprep.subr.bf16.mxu0 0
        %1450 = vmatpush1.bf16.msra.mxu0 %v1368
        %1451 = vmatprep.subr.bf16.mxu0 0
        %1452 = vmatpush1.bf16.msra.mxu0 %v1370
        %1453 = vmatprep.subr.bf16.mxu0 0
        %1454 = vmatpush1.bf16.msra.mxu0 %v1372
        %1455 = vmatprep.subr.bf16.mxu0 0
        %1456 = vmatpush1.bf16.msra.mxu0 0
        %1457 = vmatprep.subr.bf16.mxu0 0
        %1458 = vmatpush1.bf16.msra.mxu0 0
        %1459 = vmatprep.subr.bf16.mxu0 0
        %1460 = vmatpush1.bf16.msra.mxu0 0
        %1461 = vmatprep.subr.bf16.mxu0 0
        %1462 = vmatpush1.bf16.msra.mxu0 0
        %1463 = vmatprep.subr.bf16.mxu0 0
        %1464 = vmatpush1.bf16.msra.mxu0 0
        %1465 = vmatprep.subr.bf16.mxu0 0
        %1466 = vmatpush1.bf16.msra.mxu0 0
        %1467 = vmatprep.subr.bf16.mxu0 0
        %1468 = vmatpush1.bf16.msra.mxu0 0
        %1469 = vmatprep.subr.bf16.mxu0 0
        %1470 = vmatpush1.bf16.msra.mxu0 0
        %1471 = vmatprep.subr.bf16.mxu0 0
        %1472 = vmatpush1.bf16.msra.mxu0 0
        %1473 = vmatprep.subr.bf16.mxu0 0
        %1474 = vmatpush1.bf16.msra.mxu0 0
        %1475 = vmatprep.subr.bf16.mxu0 0
        %1476 = vmatpush1.bf16.msra.mxu0 0
        %1477 = vmatprep.subr.bf16.mxu0 0
        %1478 = vmatpush1.bf16.msra.mxu0 0
        %1479 = vmatprep.subr.bf16.mxu0 0
        %1480 = vmatpush1.bf16.msra.mxu0 0
        %1481 = vmatprep.mubr.bf16.mxu0 0
        %1482 = vmatmul.mubr.bf16.gmra.mrb[0].mxu0 %v1447
        %v1483 = vpop.f32.mrb[0].mxu0
        %v1484 = vadd.f32 0.0, %v1483
        %v1485 = vpop.f32.mrb[0].mxu0
        %v1486 = vpop.f32.mrb[0].mxu0
        %v1487 = vadd.f32 0.0, %v1486
        %v1488 = vpop.f32.mrb[0].mxu0
        %1489 = vdwg.mxu0
        %v1490 = vadd.f32 %v1350, %v1484
        %v1491 = vadd.f32 %v1351, %v1487
        %s1492 = scalar_lea.vmem [#allocation6], 128
        %v1493 = vld [vmem:[%s1492] sm:$0xf]
        %v1494 = vld [vmem:[%s1492 + $0x4] sm:$0xf]
        %v1495 = vld [vmem:[%s1492 + $0x8] sm:$0xf]
        %v1496 = vld [vmem:[%s1492 + $0xc] sm:$0xf]
        %v1501 = vunpack.c.l.b16 %v1493
        %v1502 = vunpack.c.l.b16 %v1494
        %v1503 = vunpack.c.l.b16 %v1495
        %v1504 = vunpack.c.l.b16 %v1496
        %v1505 = vpack.c.b16 %v1502, %v1501
        %v1506 = vpack.c.b16 %v1504, %v1503
        %1507 = vrot.lane.b32.xlu0 %v409, 106
        %v1508 = vpop.permute.xlu0 %1507
        %1509 = vrot.lane.b32.xlu0 %v410, 106
        %v1510 = vpop.permute.xlu0 %1509
        %1511 = vrot.lane.b32.xlu0 %v411, 106
        %v1512 = vpop.permute.xlu0 %1511
        %1513 = vrot.lane.b32.xlu0 %v412, 106
        %v1514 = vpop.permute.xlu0 %1513
        %v1520 = vsel %vm425, %v1505, 0
        %v1523 = vsel %vm425, %v1506, 0
        %1525 = vmatprep.subr.bf16.mxu0 0
        %1526 = vmatpush1.bf16.msra.mxu0 %v1508
        %1527 = vmatprep.subr.bf16.mxu0 0
        %1528 = vmatpush1.bf16.msra.mxu0 %v1510
        %1529 = vmatprep.subr.bf16.mxu0 0
        %1530 = vmatpush1.bf16.msra.mxu0 %v1512
        %1531 = vmatprep.subr.bf16.mxu0 0
        %1532 = vmatpush1.bf16.msra.mxu0 %v1514
        %1533 = vmatprep.subr.bf16.mxu0 0
        %1534 = vmatpush1.bf16.msra.mxu0 0
        %1535 = vmatprep.subr.bf16.mxu0 0
        %1536 = vmatpush1.bf16.msra.mxu0 0
        %1537 = vmatprep.subr.bf16.mxu0 0
        %1538 = vmatpush1.bf16.msra.mxu0 0
        %1539 = vmatprep.subr.bf16.mxu0 0
        %1540 = vmatpush1.bf16.msra.mxu0 0
        %1541 = vmatprep.subr.bf16.mxu0 0
        %1542 = vmatpush1.bf16.msra.mxu0 0
        %1543 = vmatprep.subr.bf16.mxu0 0
        %1544 = vmatpush1.bf16.msra.mxu0 0
        %1545 = vmatprep.subr.bf16.mxu0 0
        %1546 = vmatpush1.bf16.msra.mxu0 0
        %1547 = vmatprep.subr.bf16.mxu0 0
        %1548 = vmatpush1.bf16.msra.mxu0 0
        %1549 = vmatprep.subr.bf16.mxu0 0
        %1550 = vmatpush1.bf16.msra.mxu0 0
        %1551 = vmatprep.subr.bf16.mxu0 0
        %1552 = vmatpush1.bf16.msra.mxu0 0
        %1553 = vmatprep.subr.bf16.mxu0 0
        %1554 = vmatpush1.bf16.msra.mxu0 0
        %1555 = vmatprep.subr.bf16.mxu0 0
        %1556 = vmatpush1.bf16.msra.mxu0 0
        %1557 = vmatprep.mubr.bf16.mxu0 0
        %1558 = vmatmul.mubr.bf16.gmra.mrb[0].mxu0 %v1520
        %v1559 = vpop.f32.mrb[0].mxu0
        %v1560 = vadd.f32 0.0, %v1559
        %v1561 = vpop.f32.mrb[0].mxu0
        %v1562 = vpop.f32.mrb[0].mxu0
        %v1563 = vadd.f32 0.0, %v1562
        %v1564 = vpop.f32.mrb[0].mxu0
        %1565 = vmatprep.mubr.bf16.mxu0 0
        %1566 = vmatmul.mubr.bf16.gmra.mrb[0].mxu0 %v1523
        %v1567 = vpop.f32.mrb[0].mxu0
        %v1568 = vadd.f32 0.0, %v1567
        %v1569 = vpop.f32.mrb[0].mxu0
        %v1570 = vpop.f32.mrb[0].mxu0
        %v1571 = vadd.f32 0.0, %v1570
        %v1572 = vpop.f32.mrb[0].mxu0
        %1573 = vdwg.mxu0
        %v1574 = vadd.f32 %v1434, %v1560
        %v1575 = vadd.f32 %v1435, %v1563
        %v1576 = vadd.f32 %v1436, %v1568
        %v1577 = vadd.f32 %v1437, %v1571
        %s1578 = scalar_lea.vmem [#allocation8], 64
        %v1579 = vld [vmem:[%s1578] sm:$0xf]
        %v1580 = vld [vmem:[%s1578 + $0x4] sm:$0xf]
        %v1583 = vunpack.c.l.b16 %v1579
        %v1584 = vunpack.c.l.b16 %v1580
        %v1585 = vpack.c.b16 %v1584, %v1583
        %v1587 = vsel %vm558, %v1585, 0
        %1589 = vmatprep.subr.bf16.mxu0 0
        %1590 = vmatpush1.bf16.msra.mxu0 %v1508
        %1591 = vmatprep.subr.bf16.mxu0 0
        %1592 = vmatpush1.bf16.msra.mxu0 %v1510
        %1593 = vmatprep.subr.bf16.mxu0 0
        %1594 = vmatpush1.bf16.msra.mxu0 %v1512
        %1595 = vmatprep.subr.bf16.mxu0 0
        %1596 = vmatpush1.bf16.msra.mxu0 0
        %1597 = vmatprep.subr.bf16.mxu0 0
        %1598 = vmatpush1.bf16.msra.mxu0 0
        %1599 = vmatprep.subr.bf16.mxu0 0
        %1600 = vmatpush1.bf16.msra.mxu0 0
        %1601 = vmatprep.subr.bf16.mxu0 0
        %1602 = vmatpush1.bf16.msra.mxu0 0
        %1603 = vmatprep.subr.bf16.mxu0 0
        %1604 = vmatpush1.bf16.msra.mxu0 0
        %1605 = vmatprep.subr.bf16.mxu0 0
        %1606 = vmatpush1.bf16.msra.mxu0 0
        %1607 = vmatprep.subr.bf16.mxu0 0
        %1608 = vmatpush1.bf16.msra.mxu0 0
        %1609 = vmatprep.subr.bf16.mxu0 0
        %1610 = vmatpush1.bf16.msra.mxu0 0
        %1611 = vmatprep.subr.bf16.mxu0 0
        %1612 = vmatpush1.bf16.msra.mxu0 0
        %1613 = vmatprep.subr.bf16.mxu0 0
        %1614 = vmatpush1.bf16.msra.mxu0 0
        %1615 = vmatprep.subr.bf16.mxu0 0
        %1616 = vmatpush1.bf16.msra.mxu0 0
        %1617 = vmatprep.subr.bf16.mxu0 0
        %1618 = vmatpush1.bf16.msra.mxu0 0
        %1619 = vmatprep.subr.bf16.mxu0 0
        %1620 = vmatpush1.bf16.msra.mxu0 0
        %1621 = vmatprep.mubr.bf16.mxu0 0
        %1622 = vmatmul.mubr.bf16.gmra.mrb[0].mxu0 %v1587
        %v1623 = vpop.f32.mrb[0].mxu0
        %v1624 = vadd.f32 0.0, %v1623
        %v1625 = vpop.f32.mrb[0].mxu0
        %v1626 = vpop.f32.mrb[0].mxu0
        %v1627 = vadd.f32 0.0, %v1626
        %v1628 = vpop.f32.mrb[0].mxu0
        %1629 = vdwg.mxu0
        %v1630 = vadd.f32 %v1490, %v1624
        %v1631 = vadd.f32 %v1491, %v1627
        %v1632 = vld [vmem:[%s3] sm:$0xff]
        %v1633 = vld [vmem:[%s3 + $0x8] sm:$0xff]
        %v1634 = vld [vmem:[%s3 + $0x10] sm:$0xff]
        %v1635 = vld [vmem:[%s3 + $0x18] sm:$0xff]
        %1637 = vset.pattern.permute.xlu0 0
        %1638 = vperm.xlu0 %1637, %v1632
        %v1639 = vpop.permute.xlu0 %1638
        %1642 = vset.pattern.permute.xlu0 0
        %1643 = vperm.xlu0 %1642, %v1633
        %v1644 = vpop.permute.xlu0 %1643
        %1647 = vset.pattern.permute.xlu0 0
        %1648 = vperm.xlu0 %1647, %v1634
        %v1649 = vpop.permute.xlu0 %1648
        %1652 = vset.pattern.permute.xlu0 0
        %1653 = vperm.xlu0 %1652, %v1635
        %v1654 = vpop.permute.xlu0 %1653
        %v1656 = vadd.f32 %v1574, %v1639
        %v1657 = vadd.f32 %v1575, %v1644
        %v1658 = vadd.f32 %v1576, %v1649
        %v1659 = vadd.f32 %v1577, %v1654
        %v1660 = vxor.u32 %v1656, 2147483648
        %v1661 = vxor.u32 %v1657, 2147483648
        %v1662 = vmul.f32 %v1660, 1.442695
        %v1663 = vpow.pop %v1662
        %v1664 = vmul.f32 %v1661, 1.442695
        %v1665 = vpow.pop %v1664
        %v1666 = vadd.f32 %v1663, 1.0
        %v1667 = vadd.f32 %v1665, 1.0
        %v1668 = vrcp.pop %v1666
        %v1669 = vmul.f32 1.0, %v1668
        %v1670 = vrcp.pop %v1667
        %v1671 = vmul.f32 1.0, %v1670
        %v1672 = vxor.u32 %v1658, 2147483648
        %v1673 = vxor.u32 %v1659, 2147483648
        %v1674 = vmul.f32 %v1672, 1.442695
        %v1675 = vpow.pop %v1674
        %v1676 = vmul.f32 %v1673, 1.442695
        %v1677 = vpow.pop %v1676
        %v1678 = vadd.f32 %v1675, 1.0
        %v1679 = vadd.f32 %v1677, 1.0
        %v1680 = vrcp.pop %v1678
        %v1681 = vmul.f32 1.0, %v1680
        %v1682 = vrcp.pop %v1679
        %v1683 = vmul.f32 1.0, %v1682
        %vm1684 = vcmask 900096
        %1685 = vst.msk [vmem:[#allocation2] sm:$0xff] %vm1684, 0
        %v1686 = vmul.f32 %v1669, %v362
        %v1687 = vmul.f32 %v1671, %v363
        %v1688 = vpack.c.bf16 %v1687, %v1686
        %1690 = vrot.lane.b32.xlu0 %v1688, 11
        %v1691 = vpop.permute.xlu0 %1690
        %vm1693 = vcmask 744536
        %1694 = vst.msk [vmem:[#allocation2] sm:$0xff] %vm1693, %v1691
        %v1695 = vld [vmem:[#allocation9] sm:$0xf]
        %v1696 = vld [vmem:[#allocation9 + $0x4] sm:$0xf]
        %v1697 = vld [vmem:[#allocation2] sm:$0xff]
        %v1700 = vunpack.c.l.b16 %v1695
        %v1701 = vunpack.c.l.b16 %v1696
        %v1702 = vpack.c.b16 %v1701, %v1700
        %vm1703 = vcmask 130048
        %v1705 = vsel %vm1703, %v1702, 0
        %1707 = vmatprep.subr.bf16.mxu0 0
        %1708 = vmatpush1.bf16.msra.mxu0 %v1697
        %1709 = vmatprep.subr.bf16.mxu0 0
        %1710 = vmatpush1.bf16.msra.mxu0 0
        %1711 = vmatprep.subr.bf16.mxu0 0
        %1712 = vmatpush1.bf16.msra.mxu0 0
        %1713 = vmatprep.subr.bf16.mxu0 0
        %1714 = vmatpush1.bf16.msra.mxu0 0
        %1715 = vmatprep.subr.bf16.mxu0 0
        %1716 = vmatpush1.bf16.msra.mxu0 0
        %1717 = vmatprep.subr.bf16.mxu0 0
        %1718 = vmatpush1.bf16.msra.mxu0 0
        %1719 = vmatprep.subr.bf16.mxu0 0
        %1720 = vmatpush1.bf16.msra.mxu0 0
        %1721 = vmatprep.subr.bf16.mxu0 0
        %1722 = vmatpush1.bf16.msra.mxu0 0
        %1723 = vmatprep.subr.bf16.mxu0 0
        %1724 = vmatpush1.bf16.msra.mxu0 0
        %1725 = vmatprep.subr.bf16.mxu0 0
        %1726 = vmatpush1.bf16.msra.mxu0 0
        %1727 = vmatprep.subr.bf16.mxu0 0
        %1728 = vmatpush1.bf16.msra.mxu0 0
        %1729 = vmatprep.subr.bf16.mxu0 0
        %1730 = vmatpush1.bf16.msra.mxu0 0
        %1731 = vmatprep.subr.bf16.mxu0 0
        %1732 = vmatpush1.bf16.msra.mxu0 0
        %1733 = vmatprep.subr.bf16.mxu0 0
        %1734 = vmatpush1.bf16.msra.mxu0 0
        %1735 = vmatprep.subr.bf16.mxu0 0
        %1736 = vmatpush1.bf16.msra.mxu0 0
        %1737 = vmatprep.subr.bf16.mxu0 0
        %1738 = vmatpush1.bf16.msra.mxu0 0
        %1739 = vmatprep.mubr.bf16.mxu0 0
        %1740 = vmatmul.mubr.bf16.gmra.mrb[0].mxu0 %v1705
        %v1741 = vpop.f32.mrb[0].mxu0
        %v1742 = vadd.f32 0.0, %v1741
        %v1743 = vpop.f32.mrb[0].mxu0
        %v1744 = vpop.f32.mrb[0].mxu0
        %v1745 = vadd.f32 0.0, %v1744
        %v1746 = vpop.f32.mrb[0].mxu0
        %1747 = vdwg.mxu0
        %v1748 = vadd.f32 %v1630, %v1742
        %v1749 = vadd.f32 %v1631, %v1745
        %s1750 = scalar_lea.vmem [#allocation9], 8
        %v1751 = vld [vmem:[%s1750] sm:$0xf]
        %v1752 = vld [vmem:[%s1750 + $0x4] sm:$0xf]
        %v1755 = vunpack.c.l.b16 %v1751
        %v1756 = vunpack.c.l.b16 %v1752
        %v1757 = vpack.c.b16 %v1756, %v1755
        %1759 = vrot.lane.b32.xlu0 %v1697, 127
        %v1760 = vpop.permute.xlu0 %1759
        %v1763 = vsel %vm1703, %v1757, 0
        %1765 = vmatprep.subr.bf16.mxu0 0
        %1766 = vmatpush1.bf16.msra.mxu0 %v1760
        %1767 = vmatprep.subr.bf16.mxu0 0
        %1768 = vmatpush1.bf16.msra.mxu0 0
        %1769 = vmatprep.subr.bf16.mxu0 0
        %1770 = vmatpush1.bf16.msra.mxu0 0
        %1771 = vmatprep.subr.bf16.mxu0 0
        %1772 = vmatpush1.bf16.msra.mxu0 0
        %1773 = vmatprep.subr.bf16.mxu0 0
        %1774 = vmatpush1.bf16.msra.mxu0 0
        %1775 = vmatprep.subr.bf16.mxu0 0
        %1776 = vmatpush1.bf16.msra.mxu0 0
        %1777 = vmatprep.subr.bf16.mxu0 0
        %1778 = vmatpush1.bf16.msra.mxu0 0
        %1779 = vmatprep.subr.bf16.mxu0 0
        %1780 = vmatpush1.bf16.msra.mxu0 0
        %1781 = vmatprep.subr.bf16.mxu0 0
        %1782 = vmatpush1.bf16.msra.mxu0 0
        %1783 = vmatprep.subr.bf16.mxu0 0
        %1784 = vmatpush1.bf16.msra.mxu0 0
        %1785 = vmatprep.subr.bf16.mxu0 0
        %1786 = vmatpush1.bf16.msra.mxu0 0
        %1787 = vmatprep.subr.bf16.mxu0 0
        %1788 = vmatpush1.bf16.msra.mxu0 0
        %1789 = vmatprep.subr.bf16.mxu0 0
        %1790 = vmatpush1.bf16.msra.mxu0 0
        %1791 = vmatprep.subr.bf16.mxu0 0
        %1792 = vmatpush1.bf16.msra.mxu0 0
        %1793 = vmatprep.subr.bf16.mxu0 0
        %1794 = vmatpush1.bf16.msra.mxu0 0
        %1795 = vmatprep.subr.bf16.mxu0 0
        %1796 = vmatpush1.bf16.msra.mxu0 0
        %1797 = vmatprep.mubr.bf16.mxu0 0
        %1798 = vmatmul.mubr.bf16.gmra.mrb[0].mxu0 %v1763
        %v1799 = vpop.f32.mrb[0].mxu0
        %v1800 = vadd.f32 0.0, %v1799
        %v1801 = vpop.f32.mrb[0].mxu0
        %v1802 = vpop.f32.mrb[0].mxu0
        %v1803 = vadd.f32 0.0, %v1802
        %v1804 = vpop.f32.mrb[0].mxu0
        %1805 = vdwg.mxu0
        %v1806 = vadd.f32 %v1748, %v1800
        %v1807 = vadd.f32 %v1749, %v1803
        %s1808 = scalar_lea.vmem [#allocation9], 16
        %v1809 = vld [vmem:[%s1808] sm:$0xf]
        %v1810 = vld [vmem:[%s1808 + $0x4] sm:$0xf]
        %v1813 = vunpack.c.l.b16 %v1809
        %v1814 = vunpack.c.l.b16 %v1810
        %v1815 = vpack.c.b16 %v1814, %v1813
        %1816 = vrot.lane.b32.xlu0 %v1697, 126
        %v1817 = vpop.permute.xlu0 %1816
        %v1820 = vsel %vm1703, %v1815, 0
        %1822 = vmatprep.subr.bf16.mxu0 0
        %1823 = vmatpush1.bf16.msra.mxu0 %v1817
        %1824 = vmatprep.subr.bf16.mxu0 0
        %1825 = vmatpush1.bf16.msra.mxu0 0
        %1826 = vmatprep.subr.bf16.mxu0 0
        %1827 = vmatpush1.bf16.msra.mxu0 0
        %1828 = vmatprep.subr.bf16.mxu0 0
        %1829 = vmatpush1.bf16.msra.mxu0 0
        %1830 = vmatprep.subr.bf16.mxu0 0
        %1831 = vmatpush1.bf16.msra.mxu0 0
        %1832 = vmatprep.subr.bf16.mxu0 0
        %1833 = vmatpush1.bf16.msra.mxu0 0
        %1834 = vmatprep.subr.bf16.mxu0 0
        %1835 = vmatpush1.bf16.msra.mxu0 0
        %1836 = vmatprep.subr.bf16.mxu0 0
        %1837 = vmatpush1.bf16.msra.mxu0 0
        %1838 = vmatprep.subr.bf16.mxu0 0
        %1839 = vmatpush1.bf16.msra.mxu0 0
        %1840 = vmatprep.subr.bf16.mxu0 0
        %1841 = vmatpush1.bf16.msra.mxu0 0
        %1842 = vmatprep.subr.bf16.mxu0 0
        %1843 = vmatpush1.bf16.msra.mxu0 0
        %1844 = vmatprep.subr.bf16.mxu0 0
        %1845 = vmatpush1.bf16.msra.mxu0 0
        %1846 = vmatprep.subr.bf16.mxu0 0
        %1847 = vmatpush1.bf16.msra.mxu0 0
        %1848 = vmatprep.subr.bf16.mxu0 0
        %1849 = vmatpush1.bf16.msra.mxu0 0
        %1850 = vmatprep.subr.bf16.mxu0 0
        %1851 = vmatpush1.bf16.msra.mxu0 0
        %1852 = vmatprep.subr.bf16.mxu0 0
        %1853 = vmatpush1.bf16.msra.mxu0 0
        %1854 = vmatprep.mubr.bf16.mxu0 0
        %1855 = vmatmul.mubr.bf16.gmra.mrb[0].mxu0 %v1820
        %v1856 = vpop.f32.mrb[0].mxu0
        %v1857 = vadd.f32 0.0, %v1856
        %v1858 = vpop.f32.mrb[0].mxu0
        %v1859 = vpop.f32.mrb[0].mxu0
        %v1860 = vadd.f32 0.0, %v1859
        %v1861 = vpop.f32.mrb[0].mxu0
        %1862 = vdwg.mxu0
        %v1863 = vadd.f32 %v1806, %v1857
        %v1864 = vadd.f32 %v1807, %v1860
        %s1865 = scalar_lea.vmem [#allocation9], 24
        %v1866 = vld [vmem:[%s1865] sm:$0xf]
        %v1867 = vld [vmem:[%s1865 + $0x4] sm:$0xf]
        %v1870 = vunpack.c.l.b16 %v1866
        %v1871 = vunpack.c.l.b16 %v1867
        %v1872 = vpack.c.b16 %v1871, %v1870
        %1873 = vrot.lane.b32.xlu0 %v1697, 118
        %v1874 = vpop.permute.xlu0 %1873
        %v1877 = vsel %vm1703, %v1872, 0
        %1879 = vmatprep.subr.bf16.mxu0 0
        %1880 = vmatpush1.bf16.msra.mxu0 %v1874
        %1881 = vmatprep.subr.bf16.mxu0 0
        %1882 = vmatpush1.bf16.msra.mxu0 0
        %1883 = vmatprep.subr.bf16.mxu0 0
        %1884 = vmatpush1.bf16.msra.mxu0 0
        %1885 = vmatprep.subr.bf16.mxu0 0
        %1886 = vmatpush1.bf16.msra.mxu0 0
        %1887 = vmatprep.subr.bf16.mxu0 0
        %1888 = vmatpush1.bf16.msra.mxu0 0
        %1889 = vmatprep.subr.bf16.mxu0 0
        %1890 = vmatpush1.bf16.msra.mxu0 0
        %1891 = vmatprep.subr.bf16.mxu0 0
        %1892 = vmatpush1.bf16.msra.mxu0 0
        %1893 = vmatprep.subr.bf16.mxu0 0
        %1894 = vmatpush1.bf16.msra.mxu0 0
        %1895 = vmatprep.subr.bf16.mxu0 0
        %1896 = vmatpush1.bf16.msra.mxu0 0
        %1897 = vmatprep.subr.bf16.mxu0 0
        %1898 = vmatpush1.bf16.msra.mxu0 0
        %1899 = vmatprep.subr.bf16.mxu0 0
        %1900 = vmatpush1.bf16.msra.mxu0 0
        %1901 = vmatprep.subr.bf16.mxu0 0
        %1902 = vmatpush1.bf16.msra.mxu0 0
        %1903 = vmatprep.subr.bf16.mxu0 0
        %1904 = vmatpush1.bf16.msra.mxu0 0
        %1905 = vmatprep.subr.bf16.mxu0 0
        %1906 = vmatpush1.bf16.msra.mxu0 0
        %1907 = vmatprep.subr.bf16.mxu0 0
        %1908 = vmatpush1.bf16.msra.mxu0 0
        %1909 = vmatprep.subr.bf16.mxu0 0
        %1910 = vmatpush1.bf16.msra.mxu0 0
        %1911 = vmatprep.mubr.bf16.mxu0 0
        %1912 = vmatmul.mubr.bf16.gmra.mrb[0].mxu0 %v1877
        %v1913 = vpop.f32.mrb[0].mxu0
        %v1914 = vadd.f32 0.0, %v1913
        %v1915 = vpop.f32.mrb[0].mxu0
        %v1916 = vpop.f32.mrb[0].mxu0
        %v1917 = vadd.f32 0.0, %v1916
        %v1918 = vpop.f32.mrb[0].mxu0
        %1919 = vdwg.mxu0
        %v1920 = vadd.f32 %v1863, %v1914
        %v1921 = vadd.f32 %v1864, %v1917
        %s1922 = scalar_lea.vmem [#allocation9], 32
        %v1923 = vld [vmem:[%s1922] sm:$0xf]
        %v1924 = vld [vmem:[%s1922 + $0x4] sm:$0xf]
        %v1927 = vunpack.c.l.b16 %v1923
        %v1928 = vunpack.c.l.b16 %v1924
        %v1929 = vpack.c.b16 %v1928, %v1927
        %1930 = vrot.lane.b32.xlu0 %v1697, 117
        %v1931 = vpop.permute.xlu0 %1930
        %v1934 = vsel %vm1703, %v1929, 0
        %1936 = vmatprep.subr.bf16.mxu0 0
        %1937 = vmatpush1.bf16.msra.mxu0 %v1931
        %1938 = vmatprep.subr.bf16.mxu0 0
        %1939 = vmatpush1.bf16.msra.mxu0 0
        %1940 = vmatprep.subr.bf16.mxu0 0
        %1941 = vmatpush1.bf16.msra.mxu0 0
        %1942 = vmatprep.subr.bf16.mxu0 0
        %1943 = vmatpush1.bf16.msra.mxu0 0
        %1944 = vmatprep.subr.bf16.mxu0 0
        %1945 = vmatpush1.bf16.msra.mxu0 0
        %1946 = vmatprep.subr.bf16.mxu0 0
        %1947 = vmatpush1.bf16.msra.mxu0 0
        %1948 = vmatprep.subr.bf16.mxu0 0
        %1949 = vmatpush1.bf16.msra.mxu0 0
        %1950 = vmatprep.subr.bf16.mxu0 0
        %1951 = vmatpush1.bf16.msra.mxu0 0
        %1952 = vmatprep.subr.bf16.mxu0 0
        %1953 = vmatpush1.bf16.msra.mxu0 0
        %1954 = vmatprep.subr.bf16.mxu0 0
        %1955 = vmatpush1.bf16.msra.mxu0 0
        %1956 = vmatprep.subr.bf16.mxu0 0
        %1957 = vmatpush1.bf16.msra.mxu0 0
        %1958 = vmatprep.subr.bf16.mxu0 0
        %1959 = vmatpush1.bf16.msra.mxu0 0
        %1960 = vmatprep.subr.bf16.mxu0 0
        %1961 = vmatpush1.bf16.msra.mxu0 0
        %1962 = vmatprep.subr.bf16.mxu0 0
        %1963 = vmatpush1.bf16.msra.mxu0 0
        %1964 = vmatprep.subr.bf16.mxu0 0
        %1965 = vmatpush1.bf16.msra.mxu0 0
        %1966 = vmatprep.subr.bf16.mxu0 0
        %1967 = vmatpush1.bf16.msra.mxu0 0
        %1968 = vmatprep.mubr.bf16.mxu0 0
        %1969 = vmatmul.mubr.bf16.gmra.mrb[0].mxu0 %v1934
        %v1970 = vpop.f32.mrb[0].mxu0
        %v1971 = vadd.f32 0.0, %v1970
        %v1972 = vpop.f32.mrb[0].mxu0
        %v1973 = vpop.f32.mrb[0].mxu0
        %v1974 = vadd.f32 0.0, %v1973
        %v1975 = vpop.f32.mrb[0].mxu0
        %1976 = vdwg.mxu0
        %v1977 = vadd.f32 %v1920, %v1971
        %v1978 = vadd.f32 %v1921, %v1974
        %s1979 = scalar_lea.vmem [#allocation9], 40
        %v1980 = vld [vmem:[%s1979] sm:$0xf]
        %v1981 = vld [vmem:[%s1979 + $0x4] sm:$0xf]
        %v1984 = vunpack.c.l.b16 %v1980
        %v1985 = vunpack.c.l.b16 %v1981
        %v1986 = vpack.c.b16 %v1985, %v1984
        %1987 = vrot.lane.b32.xlu0 %v1697, 116
        %v1988 = vpop.permute.xlu0 %1987
        %v1991 = vsel %vm1703, %v1986, 0
        %1993 = vmatprep.subr.bf16.mxu0 0
        %1994 = vmatpush1.bf16.msra.mxu0 %v1988
        %1995 = vmatprep.subr.bf16.mxu0 0
        %1996 = vmatpush1.bf16.msra.mxu0 0
        %1997 = vmatprep.subr.bf16.mxu0 0
        %1998 = vmatpush1.bf16.msra.mxu0 0
        %1999 = vmatprep.subr.bf16.mxu0 0
        %2000 = vmatpush1.bf16.msra.mxu0 0
        %2001 = vmatprep.subr.bf16.mxu0 0
        %2002 = vmatpush1.bf16.msra.mxu0 0
        %2003 = vmatprep.subr.bf16.mxu0 0
        %2004 = vmatpush1.bf16.msra.mxu0 0
        %2005 = vmatprep.subr.bf16.mxu0 0
        %2006 = vmatpush1.bf16.msra.mxu0 0
        %2007 = vmatprep.subr.bf16.mxu0 0
        %2008 = vmatpush1.bf16.msra.mxu0 0
        %2009 = vmatprep.subr.bf16.mxu0 0
        %2010 = vmatpush1.bf16.msra.mxu0 0
        %2011 = vmatprep.subr.bf16.mxu0 0
        %2012 = vmatpush1.bf16.msra.mxu0 0
        %2013 = vmatprep.subr.bf16.mxu0 0
        %2014 = vmatpush1.bf16.msra.mxu0 0
        %2015 = vmatprep.subr.bf16.mxu0 0
        %2016 = vmatpush1.bf16.msra.mxu0 0
        %2017 = vmatprep.subr.bf16.mxu0 0
        %2018 = vmatpush1.bf16.msra.mxu0 0
        %2019 = vmatprep.subr.bf16.mxu0 0
        %2020 = vmatpush1.bf16.msra.mxu0 0
        %2021 = vmatprep.subr.bf16.mxu0 0
        %2022 = vmatpush1.bf16.msra.mxu0 0
        %2023 = vmatprep.subr.bf16.mxu0 0
        %2024 = vmatpush1.bf16.msra.mxu0 0
        %2025 = vmatprep.mubr.bf16.mxu0 0
        %2026 = vmatmul.mubr.bf16.gmra.mrb[0].mxu0 %v1991
        %v2027 = vpop.f32.mrb[0].mxu0
        %v2028 = vadd.f32 0.0, %v2027
        %v2029 = vpop.f32.mrb[0].mxu0
        %v2030 = vpop.f32.mrb[0].mxu0
        %v2031 = vadd.f32 0.0, %v2030
        %v2032 = vpop.f32.mrb[0].mxu0
        %2033 = vdwg.mxu0
        %v2034 = vadd.f32 %v1977, %v2028
        %v2035 = vadd.f32 %v1978, %v2031
        %s2036 = scalar_lea.vmem [#allocation9], 48
        %v2037 = vld [vmem:[%s2036] sm:$0xf]
        %v2038 = vld [vmem:[%s2036 + $0x4] sm:$0xf]
        %v2041 = vunpack.c.l.b16 %v2037
        %v2042 = vunpack.c.l.b16 %v2038
        %v2043 = vpack.c.b16 %v2042, %v2041
        %2044 = vrot.lane.b32.xlu0 %v1697, 108
        %v2045 = vpop.permute.xlu0 %2044
        %v2048 = vsel %vm1703, %v2043, 0
        %2050 = vmatprep.subr.bf16.mxu0 0
        %2051 = vmatpush1.bf16.msra.mxu0 %v2045
        %2052 = vmatprep.subr.bf16.mxu0 0
        %2053 = vmatpush1.bf16.msra.mxu0 0
        %2054 = vmatprep.subr.bf16.mxu0 0
        %2055 = vmatpush1.bf16.msra.mxu0 0
        %2056 = vmatprep.subr.bf16.mxu0 0
        %2057 = vmatpush1.bf16.msra.mxu0 0
        %2058 = vmatprep.subr.bf16.mxu0 0
        %2059 = vmatpush1.bf16.msra.mxu0 0
        %2060 = vmatprep.subr.bf16.mxu0 0
        %2061 = vmatpush1.bf16.msra.mxu0 0
        %2062 = vmatprep.subr.bf16.mxu0 0
        %2063 = vmatpush1.bf16.msra.mxu0 0
        %2064 = vmatprep.subr.bf16.mxu0 0
        %2065 = vmatpush1.bf16.msra.mxu0 0
        %2066 = vmatprep.subr.bf16.mxu0 0
        %2067 = vmatpush1.bf16.msra.mxu0 0
        %2068 = vmatprep.subr.bf16.mxu0 0
        %2069 = vmatpush1.bf16.msra.mxu0 0
        %2070 = vmatprep.subr.bf16.mxu0 0
        %2071 = vmatpush1.bf16.msra.mxu0 0
        %2072 = vmatprep.subr.bf16.mxu0 0
        %2073 = vmatpush1.bf16.msra.mxu0 0
        %2074 = vmatprep.subr.bf16.mxu0 0
        %2075 = vmatpush1.bf16.msra.mxu0 0
        %2076 = vmatprep.subr.bf16.mxu0 0
        %2077 = vmatpush1.bf16.msra.mxu0 0
        %2078 = vmatprep.subr.bf16.mxu0 0
        %2079 = vmatpush1.bf16.msra.mxu0 0
        %2080 = vmatprep.subr.bf16.mxu0 0
        %2081 = vmatpush1.bf16.msra.mxu0 0
        %2082 = vmatprep.mubr.bf16.mxu0 0
        %2083 = vmatmul.mubr.bf16.gmra.mrb[0].mxu0 %v2048
        %v2084 = vpop.f32.mrb[0].mxu0
        %v2085 = vadd.f32 0.0, %v2084
        %v2086 = vpop.f32.mrb[0].mxu0
        %v2087 = vpop.f32.mrb[0].mxu0
        %v2088 = vadd.f32 0.0, %v2087
        %v2089 = vpop.f32.mrb[0].mxu0
        %2090 = vdwg.mxu0
        %v2091 = vadd.f32 %v2034, %v2085
        %v2092 = vadd.f32 %v2035, %v2088
        %s2093 = scalar_lea.vmem [#allocation9], 56
        %v2094 = vld [vmem:[%s2093] sm:$0xf]
        %v2095 = vld [vmem:[%s2093 + $0x4] sm:$0xf]
        %v2098 = vunpack.c.l.b16 %v2094
        %v2099 = vunpack.c.l.b16 %v2095
        %v2100 = vpack.c.b16 %v2099, %v2098
        %2101 = vrot.lane.b32.xlu0 %v1697, 107
        %v2102 = vpop.permute.xlu0 %2101
        %v2105 = vsel %vm1703, %v2100, 0
        %2107 = vmatprep.subr.bf16.mxu0 0
        %2108 = vmatpush1.bf16.msra.mxu0 %v2102
        %2109 = vmatprep.subr.bf16.mxu0 0
        %2110 = vmatpush1.bf16.msra.mxu0 0
        %2111 = vmatprep.subr.bf16.mxu0 0
        %2112 = vmatpush1.bf16.msra.mxu0 0
        %2113 = vmatprep.subr.bf16.mxu0 0
        %2114 = vmatpush1.bf16.msra.mxu0 0
        %2115 = vmatprep.subr.bf16.mxu0 0
        %2116 = vmatpush1.bf16.msra.mxu0 0
        %2117 = vmatprep.subr.bf16.mxu0 0
        %2118 = vmatpush1.bf16.msra.mxu0 0
        %2119 = vmatprep.subr.bf16.mxu0 0
        %2120 = vmatpush1.bf16.msra.mxu0 0
        %2121 = vmatprep.subr.bf16.mxu0 0
        %2122 = vmatpush1.bf16.msra.mxu0 0
        %2123 = vmatprep.subr.bf16.mxu0 0
        %2124 = vmatpush1.bf16.msra.mxu0 0
        %2125 = vmatprep.subr.bf16.mxu0 0
        %2126 = vmatpush1.bf16.msra.mxu0 0
        %2127 = vmatprep.subr.bf16.mxu0 0
        %2128 = vmatpush1.bf16.msra.mxu0 0
        %2129 = vmatprep.subr.bf16.mxu0 0
        %2130 = vmatpush1.bf16.msra.mxu0 0
        %2131 = vmatprep.subr.bf16.mxu0 0
        %2132 = vmatpush1.bf16.msra.mxu0 0
        %2133 = vmatprep.subr.bf16.mxu0 0
        %2134 = vmatpush1.bf16.msra.mxu0 0
        %2135 = vmatprep.subr.bf16.mxu0 0
        %2136 = vmatpush1.bf16.msra.mxu0 0
        %2137 = vmatprep.subr.bf16.mxu0 0
        %2138 = vmatpush1.bf16.msra.mxu0 0
        %2139 = vmatprep.mubr.bf16.mxu0 0
        %2140 = vmatmul.mubr.bf16.gmra.mrb[0].mxu0 %v2105
        %v2141 = vpop.f32.mrb[0].mxu0
        %v2142 = vadd.f32 0.0, %v2141
        %v2143 = vpop.f32.mrb[0].mxu0
        %v2144 = vpop.f32.mrb[0].mxu0
        %v2145 = vadd.f32 0.0, %v2144
        %v2146 = vpop.f32.mrb[0].mxu0
        %2147 = vdwg.mxu0
        %v2148 = vadd.f32 %v2091, %v2142
        %v2149 = vadd.f32 %v2092, %v2145
        %s2150 = scalar_lea.vmem [#allocation9], 64
        %v2151 = vld [vmem:[%s2150] sm:$0xf]
        %v2152 = vld [vmem:[%s2150 + $0x4] sm:$0xf]
        %v2155 = vunpack.c.l.b16 %v2151
        %v2156 = vunpack.c.l.b16 %v2152
        %v2157 = vpack.c.b16 %v2156, %v2155
        %2158 = vrot.lane.b32.xlu0 %v1697, 106
        %v2159 = vpop.permute.xlu0 %2158
        %v2162 = vsel %vm1703, %v2157, 0
        %2164 = vmatprep.subr.bf16.mxu0 0
        %2165 = vmatpush1.bf16.msra.mxu0 %v2159
        %2166 = vmatprep.subr.bf16.mxu0 0
        %2167 = vmatpush1.bf16.msra.mxu0 0
        %2168 = vmatprep.subr.bf16.mxu0 0
        %2169 = vmatpush1.bf16.msra.mxu0 0
        %2170 = vmatprep.subr.bf16.mxu0 0
        %2171 = vmatpush1.bf16.msra.mxu0 0
        %2172 = vmatprep.subr.bf16.mxu0 0
        %2173 = vmatpush1.bf16.msra.mxu0 0
        %2174 = vmatprep.subr.bf16.mxu0 0
        %2175 = vmatpush1.bf16.msra.mxu0 0
        %2176 = vmatprep.subr.bf16.mxu0 0
        %2177 = vmatpush1.bf16.msra.mxu0 0
        %2178 = vmatprep.subr.bf16.mxu0 0
        %2179 = vmatpush1.bf16.msra.mxu0 0
        %2180 = vmatprep.subr.bf16.mxu0 0
        %2181 = vmatpush1.bf16.msra.mxu0 0
        %2182 = vmatprep.subr.bf16.mxu0 0
        %2183 = vmatpush1.bf16.msra.mxu0 0
        %2184 = vmatprep.subr.bf16.mxu0 0
        %2185 = vmatpush1.bf16.msra.mxu0 0
        %2186 = vmatprep.subr.bf16.mxu0 0
        %2187 = vmatpush1.bf16.msra.mxu0 0
        %2188 = vmatprep.subr.bf16.mxu0 0
        %2189 = vmatpush1.bf16.msra.mxu0 0
        %2190 = vmatprep.subr.bf16.mxu0 0
        %2191 = vmatpush1.bf16.msra.mxu0 0
        %2192 = vmatprep.subr.bf16.mxu0 0
        %2193 = vmatpush1.bf16.msra.mxu0 0
        %2194 = vmatprep.subr.bf16.mxu0 0
        %2195 = vmatpush1.bf16.msra.mxu0 0
        %2196 = vmatprep.mubr.bf16.mxu0 0
        %2197 = vmatmul.mubr.bf16.gmra.mrb[0].mxu0 %v2162
        %v2198 = vpop.f32.mrb[0].mxu0
        %v2199 = vadd.f32 0.0, %v2198
        %v2200 = vpop.f32.mrb[0].mxu0
        %v2201 = vpop.f32.mrb[0].mxu0
        %v2202 = vadd.f32 0.0, %v2201
        %v2203 = vpop.f32.mrb[0].mxu0
        %2204 = vdwg.mxu0
        %v2205 = vadd.f32 %v2148, %v2199
        %v2206 = vadd.f32 %v2149, %v2202
        %v2207 = vld [vmem:[%s6] sm:$0xff]
        %v2208 = vld [vmem:[%s6 + $0x8] sm:$0xff]
        %2210 = vset.pattern.permute.xlu0 0
        %2211 = vperm.xlu0 %2210, %v2207
        %v2212 = vpop.permute.xlu0 %2211
        %2215 = vset.pattern.permute.xlu0 0
        %2216 = vperm.xlu0 %2215, %v2208
        %v2217 = vpop.permute.xlu0 %2216
        %v2219 = vadd.f32 %v2205, %v2212
        %v2220 = vadd.f32 %v2206, %v2217
        %v2221 = vtanh.pop %v2219
        %v2222 = vtanh.pop %v2220
        %v2223 = vsub.f32 1.0, %v1681
        %v2224 = vsub.f32 1.0, %v1683
        %v2225 = vmul.f32 %v2223, %v362
        %v2226 = vmul.f32 %v2224, %v363
        %v2227 = vmul.f32 %v1681, %v2221
        %v2228 = vmul.f32 %v1683, %v2222
        %v2229 = vadd.f32 %v2225, %v2227
        %v2230 = vadd.f32 %v2226, %v2228
        %vm2231 = vcmask 654336
        %2232 = vst.msk [vmem:[%s355] sm:$0xff] %vm2231, %v2229
        %2233 = vst.msk [vmem:[%s355 + $0x8] sm:$0xff] %vm2231, %v2230
        %s2234 = sand.u32 %s191, 1
        %s2235 = scalar_lea.sflag [#allocation5], %s2234
        %s2236 = sand.u32 %s191, 1
        %s2237 = smul.addr %s2236, 16
        %s2238 = scalar_lea.vmem [#allocation11], %s2237
        // Predicated region
        $region65: #{tpu_custom_call.1} parent=47 // pred_check
          %p2239 = pneg %p201
        $region66: #{tpu_custom_call.1} parent=47 // pred_check_branch
          %2241 = sbr.rel (%p2239) target = $region68
        $region67: #{tpu_custom_call.1} parent=47 // pred_region
          %s2243 = ssub.s32 256, 256
          %2244 = vsyncadd %s2235, %s2243
          %s2245 = smul.addr %s26, 2
          %s2246 = smul.addr %s2245, 128
          %s2247 = scalar_lea.hbm %s7, %s2246
          %s2248 = sshll.u32 %s2238, 4
          %s2249 = int_to_ptr.vmem [resolvable:$true] %s2248
          %2254 = dma.vmem_to_hbm [thread:$0]  %s2249, 256, %s2247, %s2235, 128, 128, 8
        $region68: #{tpu_custom_call.1} parent=47 // pred_fallthru
          _
      $region48: #{tpu_custom_call.1} parent=5 // pred_fallthru
        _
      %p2255 = scmp.le.s32.totalorder 2, %s21
      // Predicated region
      $region69: #{tpu_custom_call.1} parent=5 // pred_check
        %p2256 = pneg %p2255
      $region70: #{tpu_custom_call.1} parent=5 // pred_check_branch
        %2258 = sbr.rel (%p2256) target = $region72
      $region71: #{tpu_custom_call.1} parent=5 // pred_region
        %s2259 = ssub.s32 %s21, 2
        // Predicated region
        $region73: #{tpu_custom_call.1} parent=71 // pred_check
          %p2260 = pneg %p207
        $region74: #{tpu_custom_call.1} parent=71 // pred_check_branch
          %2262 = sbr.rel (%p2260) target = $region76
        $region75: #{tpu_custom_call.1} parent=71 // pred_region
          %s2263 = sand.u32 %s192, 1
          %s2264 = scalar_lea.sflag [#allocation5], %s2263
          %s2265 = sand.u32 %s192, 1
          %s2266 = smul.addr %s2265, 16
          %s2267 = scalar_lea.vmem [#allocation11], %s2266
          %2268 = dma.done %s2264, 256
        $region76: #{tpu_custom_call.1} parent=71 // pred_fallthru
          _
      $region72: #{tpu_custom_call.1} parent=5 // pred_fallthru
        _
    $region6: #{tpu_custom_call.1} parent=1 // loop_footer
      %s25 = sadd.s32 1, %s21
    $region7: #{tpu_custom_call.1} parent=1 // loop_footer_branch
      %20 = sbr.rel target = $region3
    $region8: #{tpu_custom_call.1} parent=1 // loop_exit
      _
    %2269 = vsyncpa [#allocation4], 1
    %s2270 = scalar_lea.sflag [#allocation4], 1
    %2271 = vsyncpa %s2270, 1
    %2272 = vsyncpa [#allocation7], 1
    %2273 = vsyncpa [#allocation10], 1
    %2274 = vsyncpa [#allocation5], 1
    %s2275 = scalar_lea.sflag [#allocation5], 1
    %2276 = vsyncpa %s2275, 1

</llo_original>
